<compile_context>
chip_gen: v6e
topology: v6e:2x2x1
jax: 0.10.0
libtpu: 0.0.40
codegen_flags: <defaults>
</compile_context>

<pallas_src>
import jax
import jax.numpy as jnp
from jax import lax
from jax.experimental import pallas as pl
from jax.experimental.pallas import tpu as pltpu

# ---------------- problem sizes (small, consistent with the module) -------
N, C_IN, H, W = 2, 4, 16, 16
C_MID = 8
FEAT_DIM = 32            # stand-in for feat_dim=512, kept small per instructions
FEAT_PAD = 128           # lane-dense output width; wrapper slices back
N_PAD = 8                # batch padded to 8 sublanes for a dense (8,128) store
HW = H * W

H_PAD, W_PAD = H + 2, W + 2
S = H_PAD * W_PAD                    # 324 flattened padded pixels per sample
L_OUT = N * S                        # 648 conv-output lane positions
SHIFTS = tuple(dy * W_PAD + dx for dy in range(3) for dx in range(3))
L_IN = 768                           # >= L_OUT + max(SHIFTS) = 686, multiple of 128
C_AUG = C_IN + 1                     # + ones row (carries conv bias / bias channel)
C_AUG_PAD = 8                        # sublane pad of the image slab
C_ACC = 16                           # C_MID conv channels + 1 bias-carrier, pad to 16


# ---------------- Pallas kernel -------------------------------------------
def adaface_backbone_kernel(x_ref, wtap_ref, pool_ref, wl_ref, o_ref):
    # x_ref   : (C_AUG_PAD, L_IN)     bf16  channels(+ones row) x flat padded pixels
    # wtap_ref: (9, C_ACC, C_AUG_PAD) bf16  per-tap conv weights; tap 0 also carries
    #                                       the conv bias and the bias-carrier row
    # pool_ref: (L_OUT, N_PAD)        f32   masked block-mean matrix (1/HW at valid
    #                                       pixels of sample n in column n, else 0)
    # wl_ref  : (C_ACC, FEAT_PAD)     f32   linear weight rows + linear-bias row
    # o_ref   : (N_PAD, FEAT_PAD)     f32   padded embeddings (dense (8,128) store)

    xv = x_ref[...]                                     # whole slab, ~12 KB

    # In-kernel im2col: conv accumulated as 9 shifted-slice matmuls,
    # bf16 operands, f32 accumulation (on v7x the chain can stay in the MRB).
    conv = jnp.zeros((C_ACC, L_OUT), jnp.float32)
    for b, s in enumerate(SHIFTS):
        xs = xv[:, s:s + L_OUT]                         # static lane slice (XLU shift)
        conv = conv + jnp.dot(wtap_ref[b], xs,
                              preferred_element_type=jnp.float32)

    conv = jnp.maximum(conv, 0.0)                       # ReLU (f32 VPU); bias row stays 1

    # Masked global-average-pool, MXU-native orientation:
    # (C_ACC, L_OUT) @ (L_OUT, N_PAD) -> (C_ACC, N_PAD); masks garbage border
    # positions and folds the 1/HW mean.
    pooled = jnp.dot(conv, pool_ref[...], preferred_element_type=jnp.float32)

    # Final linear with the bias folded in: bias-carrier row of pooled (==1 for
    # valid samples) times the bias row of wl_ref.  (8,16) x (16,128) -> (8,128).
    emb = jnp.dot(pooled.T, wl_ref[...], preferred_element_type=jnp.float32)
    o_ref[...] = emb.astype(o_ref.dtype)


# ---------------- one-time parameter prep (hoisted out of per-call path) ---
def prepare_params(wc_hwio, bc, wl, bl):
    """Build kernel-side constants once; wc_hwio is (3, 3, C_IN, C_MID)."""
    taps = []
    for dy in range(3):
        for dx in range(3):
            blk = jnp.zeros((C_ACC, C_AUG_PAD), jnp.float32)
            blk = blk.at[:C_MID, :C_IN].set(wc_hwio[dy, dx].T)   # (C_MID, C_IN)
            if dy == 0 and dx == 0:
                blk = blk.at[:C_MID, C_IN].set(bc)   # conv bias via the ones row
                blk = blk.at[C_MID, C_IN].set(1.0)   # bias-carrier channel -> 1
            taps.append(blk)
    wtap = jnp.stack(taps, axis=0).astype(jnp.bfloat16)           # (9, C_ACC, 8)

    # masked block-mean matrix, pre-transposed (L_OUT, N_PAD); column n has
    # 1/HW at the flat positions of sample n's valid output pixels, 0 elsewhere
    # (so padded-border garbage and padded batch columns contribute nothing).
    mask = jnp.zeros((N, H_PAD, W_PAD), jnp.float32)
    mask = mask.at[:, :H, :W].set(1.0 / HW)
    mask = mask.reshape(N, S)
    eye = (jnp.arange(N)[:, None] == jnp.arange(N_PAD)[None, :]).astype(jnp.float32)
    pool_nt = (mask[:, :, None] * eye[:, None, :]).reshape(L_OUT, N_PAD)

    # linear weight + bias row, lane-padded to 128
    wl_aug = jnp.zeros((C_ACC, FEAT_PAD), jnp.float32)
    wl_aug = wl_aug.at[:C_MID, :FEAT_DIM].set(wl)
    wl_aug = wl_aug.at[C_MID, :FEAT_DIM].set(bl)
    return wtap, pool_nt, wl_aug


# ---------------- per-call forward ------------------------------------------
def adaface_forward(x_nchw, wtap, pool_nt, wl_aug):
    """AdaFace.forward(x) == backbone(x) -> embeddings of shape (N, FEAT_DIM)."""
    # Only per-call host prep: flatten the zero-padded image into the
    # (channels+ones, flat pixels) slab (same size as the input; no im2col).
    xp = jnp.pad(x_nchw, ((0, 0), (0, 0), (1, 1), (1, 1)))        # (N, C, 18, 18)
    xf = jnp.transpose(xp, (1, 0, 2, 3)).reshape(C_IN, L_OUT)     # (C_IN, 648)
    xf = jnp.concatenate([xf, jnp.ones((1, L_OUT), xf.dtype)], axis=0)
    xf = jnp.pad(xf, ((0, C_AUG_PAD - C_AUG), (0, L_IN - L_OUT)))  # (8, 768)
    xf = xf.astype(jnp.bfloat16)                                   # MXU operand dtype

    vmem = pl.BlockSpec(memory_space=pltpu.MemorySpace.VMEM)
    out = pl.pallas_call(
        adaface_backbone_kernel,
        out_shape=jax.ShapeDtypeStruct((N_PAD, FEAT_PAD), jnp.float32),
        in_specs=[vmem, vmem, vmem, vmem],
        out_specs=vmem,
        compiler_params=pltpu.CompilerParams(vmem_limit_bytes=16 * 1024 * 1024),
    )(xf, wtap, pool_nt, wl_aug)
    return out[:N, :FEAT_DIM]


# ---------------- deterministic params + run -------------------------------
if __name__ == "__main__":
    key = jax.random.PRNGKey(0)
    k_x, k_wc, k_bc, k_wl, k_bl = jax.random.split(key, 5)

    x = jax.random.normal(k_x, (N, C_IN, H, W), dtype=jnp.float32)

    # Deterministic synthetic backbone parameters (HWIO conv layout).
    wc = 0.05 * jax.random.normal(k_wc, (3, 3, C_IN, C_MID), dtype=jnp.float32)
    bc = 0.01 * jax.random.normal(k_bc, (C_MID,), dtype=jnp.float32)
    wl = 0.05 * jax.random.normal(k_wl, (C_MID, FEAT_DIM), dtype=jnp.float32)
    bl = 0.01 * jax.random.normal(k_bl, (FEAT_DIM,), dtype=jnp.float32)

    wtap, pool_nt, wl_aug = prepare_params(wc, bc, wl, bl)   # hoisted, once

    fwd = jax.jit(adaface_forward)
    emb = fwd(x, wtap, pool_nt, wl_aug)
    jax.block_until_ready(emb)

    # Pure-JAX reference using the same bf16-rounded conv operands (the kernel
    # runs the conv matmul in bf16 with f32 accumulation).
    xb = x.astype(jnp.bfloat16).astype(jnp.float32)
    wcb = wc.astype(jnp.bfloat16).astype(jnp.float32)
    bcb = bc.astype(jnp.bfloat16).astype(jnp.float32)
    x_nhwc = jnp.transpose(xb, (0, 2, 3, 1))
    conv = lax.conv_general_dilated(
        x_nhwc, wcb, (1, 1), "SAME",
        dimension_numbers=("NHWC", "HWIO", "NHWC"),
        precision=lax.Precision.HIGHEST)
    conv = jnp.maximum(conv + bcb[None, None, None, :], 0.0)
    pooled = conv.mean(axis=(1, 2))                               # (N, C_MID)
    ref = jnp.dot(pooled, wl, precision=lax.Precision.HIGHEST) + bl[None, :]

    assert emb.shape == (N, FEAT_DIM)
    assert jnp.allclose(emb, ref, atol=1e-4, rtol=1e-4)
    print("KERNEL_OK")
</pallas_src>

<mosaic_0001>
module attributes {stable_mosaic.version = 11 : i64} {
  func.func @adaface_backbone_kernel(%arg0: memref<8x768xbf16, #tpu.memory_space<vmem>>, %arg1: memref<9x16x8xbf16, #tpu.memory_space<vmem>>, %arg2: memref<648x8xf32, #tpu.memory_space<vmem>>, %arg3: memref<16x128xf32, #tpu.memory_space<vmem>>, %arg4: memref<8x128xf32, #tpu.memory_space<vmem>>) attributes {dimension_semantics = [], scalar_prefetch = 0 : i64, scratch_operands = 0 : i64, tpu.core_type = #tpu.core_type<tc>} {
    %c0 = arith.constant 0 : index
    %c0_0 = arith.constant 0 : index
    %0 = vector.load %arg0[%c0, %c0_0] : memref<8x768xbf16, #tpu.memory_space<vmem>>, vector<8x768xbf16>
    %cst = arith.constant 0.000000e+00 : f32
    %1 = vector.broadcast %cst : f32 to vector<16x648xf32>
    %2 = vector.extract_strided_slice %0 {offsets = [0, 0], sizes = [8, 648], strides = [1, 1]} : vector<8x768xbf16> to vector<8x648xbf16>
    %c0_1 = arith.constant 0 : index
    %c0_2 = arith.constant 0 : index
    %c0_3 = arith.constant 0 : index
    %3 = vector.load %arg1[%c0_1, %c0_2, %c0_3] : memref<9x16x8xbf16, #tpu.memory_space<vmem>>, vector<1x16x8xbf16>
    %4 = vector.shape_cast %3 : vector<1x16x8xbf16> to vector<16x8xbf16>
    %cst_4 = arith.constant dense<0.000000e+00> : vector<16x648xf32>
    %5 = tpu.matmul %4, %2, %cst_4 {dimension_numbers = #tpu.dot_dimension_numbers<[1], [0], [0], [1], [0, 0, 1, 1], [], []>} : vector<16x8xbf16>, vector<8x648xbf16>, vector<16x648xf32> -> vector<16x648xf32>
    %6 = arith.addf %1, %5 : vector<16x648xf32>
    %7 = vector.extract_strided_slice %0 {offsets = [0, 1], sizes = [8, 648], strides = [1, 1]} : vector<8x768xbf16> to vector<8x648xbf16>
    %c1 = arith.constant 1 : index
    %c0_5 = arith.constant 0 : index
    %c0_6 = arith.constant 0 : index
    %8 = vector.load %arg1[%c1, %c0_5, %c0_6] : memref<9x16x8xbf16, #tpu.memory_space<vmem>>, vector<1x16x8xbf16>
    %9 = vector.shape_cast %8 : vector<1x16x8xbf16> to vector<16x8xbf16>
    %cst_7 = arith.constant dense<0.000000e+00> : vector<16x648xf32>
    %10 = tpu.matmul %9, %7, %cst_7 {dimension_numbers = #tpu.dot_dimension_numbers<[1], [0], [0], [1], [0, 0, 1, 1], [], []>} : vector<16x8xbf16>, vector<8x648xbf16>, vector<16x648xf32> -> vector<16x648xf32>
    %11 = arith.addf %6, %10 : vector<16x648xf32>
    %12 = vector.extract_strided_slice %0 {offsets = [0, 2], sizes = [8, 648], strides = [1, 1]} : vector<8x768xbf16> to vector<8x648xbf16>
    %c2 = arith.constant 2 : index
    %c0_8 = arith.constant 0 : index
    %c0_9 = arith.constant 0 : index
    %13 = vector.load %arg1[%c2, %c0_8, %c0_9] : memref<9x16x8xbf16, #tpu.memory_space<vmem>>, vector<1x16x8xbf16>
    %14 = vector.shape_cast %13 : vector<1x16x8xbf16> to vector<16x8xbf16>
    %cst_10 = arith.constant dense<0.000000e+00> : vector<16x648xf32>
    %15 = tpu.matmul %14, %12, %cst_10 {dimension_numbers = #tpu.dot_dimension_numbers<[1], [0], [0], [1], [0, 0, 1, 1], [], []>} : vector<16x8xbf16>, vector<8x648xbf16>, vector<16x648xf32> -> vector<16x648xf32>
    %16 = arith.addf %11, %15 : vector<16x648xf32>
    %17 = vector.extract_strided_slice %0 {offsets = [0, 18], sizes = [8, 648], strides = [1, 1]} : vector<8x768xbf16> to vector<8x648xbf16>
    %c3 = arith.constant 3 : index
    %c0_11 = arith.constant 0 : index
    %c0_12 = arith.constant 0 : index
    %18 = vector.load %arg1[%c3, %c0_11, %c0_12] : memref<9x16x8xbf16, #tpu.memory_space<vmem>>, vector<1x16x8xbf16>
    %19 = vector.shape_cast %18 : vector<1x16x8xbf16> to vector<16x8xbf16>
    %cst_13 = arith.constant dense<0.000000e+00> : vector<16x648xf32>
    %20 = tpu.matmul %19, %17, %cst_13 {dimension_numbers = #tpu.dot_dimension_numbers<[1], [0], [0], [1], [0, 0, 1, 1], [], []>} : vector<16x8xbf16>, vector<8x648xbf16>, vector<16x648xf32> -> vector<16x648xf32>
    %21 = arith.addf %16, %20 : vector<16x648xf32>
    %22 = vector.extract_strided_slice %0 {offsets = [0, 19], sizes = [8, 648], strides = [1, 1]} : vector<8x768xbf16> to vector<8x648xbf16>
    %c4 = arith.constant 4 : index
    %c0_14 = arith.constant 0 : index
    %c0_15 = arith.constant 0 : index
    %23 = vector.load %arg1[%c4, %c0_14, %c0_15] : memref<9x16x8xbf16, #tpu.memory_space<vmem>>, vector<1x16x8xbf16>
    %24 = vector.shape_cast %23 : vector<1x16x8xbf16> to vector<16x8xbf16>
    %cst_16 = arith.constant dense<0.000000e+00> : vector<16x648xf32>
    %25 = tpu.matmul %24, %22, %cst_16 {dimension_numbers = #tpu.dot_dimension_numbers<[1], [0], [0], [1], [0, 0, 1, 1], [], []>} : vector<16x8xbf16>, vector<8x648xbf16>, vector<16x648xf32> -> vector<16x648xf32>
    %26 = arith.addf %21, %25 : vector<16x648xf32>
    %27 = vector.extract_strided_slice %0 {offsets = [0, 20], sizes = [8, 648], strides = [1, 1]} : vector<8x768xbf16> to vector<8x648xbf16>
    %c5 = arith.constant 5 : index
    %c0_17 = arith.constant 0 : index
    %c0_18 = arith.constant 0 : index
    %28 = vector.load %arg1[%c5, %c0_17, %c0_18] : memref<9x16x8xbf16, #tpu.memory_space<vmem>>, vector<1x16x8xbf16>
    %29 = vector.shape_cast %28 : vector<1x16x8xbf16> to vector<16x8xbf16>
    %cst_19 = arith.constant dense<0.000000e+00> : vector<16x648xf32>
    %30 = tpu.matmul %29, %27, %cst_19 {dimension_numbers = #tpu.dot_dimension_numbers<[1], [0], [0], [1], [0, 0, 1, 1], [], []>} : vector<16x8xbf16>, vector<8x648xbf16>, vector<16x648xf32> -> vector<16x648xf32>
    %31 = arith.addf %26, %30 : vector<16x648xf32>
    %32 = vector.extract_strided_slice %0 {offsets = [0, 36], sizes = [8, 648], strides = [1, 1]} : vector<8x768xbf16> to vector<8x648xbf16>
    %c6 = arith.constant 6 : index
    %c0_20 = arith.constant 0 : index
    %c0_21 = arith.constant 0 : index
    %33 = vector.load %arg1[%c6, %c0_20, %c0_21] : memref<9x16x8xbf16, #tpu.memory_space<vmem>>, vector<1x16x8xbf16>
    %34 = vector.shape_cast %33 : vector<1x16x8xbf16> to vector<16x8xbf16>
    %cst_22 = arith.constant dense<0.000000e+00> : vector<16x648xf32>
    %35 = tpu.matmul %34, %32, %cst_22 {dimension_numbers = #tpu.dot_dimension_numbers<[1], [0], [0], [1], [0, 0, 1, 1], [], []>} : vector<16x8xbf16>, vector<8x648xbf16>, vector<16x648xf32> -> vector<16x648xf32>
    %36 = arith.addf %31, %35 : vector<16x648xf32>
    %37 = vector.extract_strided_slice %0 {offsets = [0, 37], sizes = [8, 648], strides = [1, 1]} : vector<8x768xbf16> to vector<8x648xbf16>
    %c7 = arith.constant 7 : index
    %c0_23 = arith.constant 0 : index
    %c0_24 = arith.constant 0 : index
    %38 = vector.load %arg1[%c7, %c0_23, %c0_24] : memref<9x16x8xbf16, #tpu.memory_space<vmem>>, vector<1x16x8xbf16>
    %39 = vector.shape_cast %38 : vector<1x16x8xbf16> to vector<16x8xbf16>
    %cst_25 = arith.constant dense<0.000000e+00> : vector<16x648xf32>
    %40 = tpu.matmul %39, %37, %cst_25 {dimension_numbers = #tpu.dot_dimension_numbers<[1], [0], [0], [1], [0, 0, 1, 1], [], []>} : vector<16x8xbf16>, vector<8x648xbf16>, vector<16x648xf32> -> vector<16x648xf32>
    %41 = arith.addf %36, %40 : vector<16x648xf32>
    %42 = vector.extract_strided_slice %0 {offsets = [0, 38], sizes = [8, 648], strides = [1, 1]} : vector<8x768xbf16> to vector<8x648xbf16>
    %c8 = arith.constant 8 : index
    %c0_26 = arith.constant 0 : index
    %c0_27 = arith.constant 0 : index
    %43 = vector.load %arg1[%c8, %c0_26, %c0_27] : memref<9x16x8xbf16, #tpu.memory_space<vmem>>, vector<1x16x8xbf16>
    %44 = vector.shape_cast %43 : vector<1x16x8xbf16> to vector<16x8xbf16>
    %cst_28 = arith.constant dense<0.000000e+00> : vector<16x648xf32>
    %45 = tpu.matmul %44, %42, %cst_28 {dimension_numbers = #tpu.dot_dimension_numbers<[1], [0], [0], [1], [0, 0, 1, 1], [], []>} : vector<16x8xbf16>, vector<8x648xbf16>, vector<16x648xf32> -> vector<16x648xf32>
    %46 = arith.addf %41, %45 : vector<16x648xf32>
    %cst_29 = arith.constant 0.000000e+00 : f32
    %47 = vector.broadcast %cst_29 : f32 to vector<16x648xf32>
    %48 = arith.maximumf %46, %47 : vector<16x648xf32>
    %c0_30 = arith.constant 0 : index
    %c0_31 = arith.constant 0 : index
    %49 = vector.load %arg2[%c0_30, %c0_31] : memref<648x8xf32, #tpu.memory_space<vmem>>, vector<648x8xf32>
    %cst_32 = arith.constant dense<0.000000e+00> : vector<16x8xf32>
    %50 = tpu.matmul %48, %49, %cst_32 {dimension_numbers = #tpu.dot_dimension_numbers<[1], [0], [0], [1], [0, 0, 1, 1], [], []>} : vector<16x648xf32>, vector<648x8xf32>, vector<16x8xf32> -> vector<16x8xf32>
    %51 = tpu.transpose %50, [1, 0] : vector<16x8xf32> -> vector<8x16xf32>
    %c0_33 = arith.constant 0 : index
    %c0_34 = arith.constant 0 : index
    %52 = vector.load %arg3[%c0_33, %c0_34] : memref<16x128xf32, #tpu.memory_space<vmem>>, vector<16x128xf32>
    %cst_35 = arith.constant dense<0.000000e+00> : vector<8x128xf32>
    %53 = tpu.matmul %51, %52, %cst_35 {dimension_numbers = #tpu.dot_dimension_numbers<[1], [0], [0], [1], [0, 0, 1, 1], [], []>} : vector<8x16xf32>, vector<16x128xf32>, vector<8x128xf32> -> vector<8x128xf32>
    %c0_36 = arith.constant 0 : index
    %c0_37 = arith.constant 0 : index
    %54 = vector.load %arg4[%c0_36, %c0_37] : memref<8x128xf32, #tpu.memory_space<vmem>>, vector<8x128xf32>
    tpu.vector_store %arg4[%c0_36, %c0_37], %53 {strides = array<i32>} : memref<8x128xf32, #tpu.memory_space<vmem>>, vector<8x128xf32>,
    return
  }
}

</mosaic_0001>

<llo_original>
// kernel: adaface_forward.1
$region0: #{adaface_forward.1}
  #allocation0 [shape = 'u32[]', space=smem, size = 0x4, offset = 0x4, fixed_abs, tag = 'smem constant byte address 0x4 - core index']
  #allocation1 [shape = 'u32[144,128]{1,0:T(1,128)}', space=vmem, size = 0x12000, scoped, tag = 'internal scratch']
  %s0 = inlined_call_operand.vmem [shape: bf16[8,768], index: 0, kind: input, shape index: {}]
  %s1 = inlined_call_operand.vmem [shape: bf16[9,16,8], index: 1, kind: input, shape index: {}]
  %s2 = inlined_call_operand.vmem [shape: f32[648,8], index: 2, kind: input, shape index: {}]
  %s3 = inlined_call_operand.vmem [shape: f32[16,128], index: 3, kind: input, shape index: {}]
  %s4 = inlined_call_operand.vmem [shape: f32[8,128], index: 4, kind: output, shape index: {}]
  %s5 = sld [smem:[#allocation0]]
  $region26: #{adaface_forward.1} parent=0
    _
  %s7 = ssub.s32 1, %s5
  %s8 = scalar_select 0, %s7, %s5
  // Predicated region
  $region2: #{adaface_forward.1} parent=0 // pred_check
    _
  $region3: #{adaface_forward.1} parent=0 // pred_check_branch
    %10 = sbr.rel (0) target = $region5
  $region4: #{adaface_forward.1} parent=0 // pred_region
    _
  $region5: #{adaface_forward.1} parent=0 // pred_fallthru
    _
  // Predicated region
  $region6: #{adaface_forward.1} parent=0 // pred_check
    _
  $region7: #{adaface_forward.1} parent=0 // pred_check_branch
    %12 = sbr.rel (0) target = $region9
  $region8: #{adaface_forward.1} parent=0 // pred_region
    _
  $region9: #{adaface_forward.1} parent=0 // pred_fallthru
    _
  // Predicated region
  $region10: #{adaface_forward.1} parent=0 // pred_check
    _
  $region11: #{adaface_forward.1} parent=0 // pred_check_branch
    %14 = sbr.rel (0) target = $region13
  $region12: #{adaface_forward.1} parent=0 // pred_region
    _
  $region13: #{adaface_forward.1} parent=0 // pred_fallthru
    _
  // Predicated region
  $region14: #{adaface_forward.1} parent=0 // pred_check
    _
  $region15: #{adaface_forward.1} parent=0 // pred_check_branch
    %16 = sbr.rel (0) target = $region17
  $region16: #{adaface_forward.1} parent=0 // pred_region
    _
  $region17: #{adaface_forward.1} parent=0 // pred_fallthru
    _
  %v18 = vld [vmem:[%s0] sm:$0xff]
  %v19 = vld [vmem:[%s0 + $0x8] sm:$0xff]
  %v20 = vld [vmem:[%s0 + $0x10] sm:$0xff]
  %v21 = vld [vmem:[%s1] sm:$0xf]
  %v22 = vld [vmem:[%s1 + $0x4] sm:$0xf]
  %s23 = scalar_lea.vmem %s1, 8
  %v24 = vld [vmem:[%s23] sm:$0xf]
  %v25 = vld [vmem:[%s23 + $0x4] sm:$0xf]
  %v28 = vunpack.c.l.b16 %v24
  %v29 = vunpack.c.l.b16 %v25
  %v30 = vpack.c.b16 %v29, %v28
  %v34 = vunpack.c.l.b16 %v18
  %v35 = vunpack.c.h.b16 %v18
  %v36 = vunpack.c.l.b16 %v19
  %v37 = vunpack.c.h.b16 %v19
  %v38 = vunpack.c.l.b16 %v20
  %v39 = vunpack.c.h.b16 %v20
  %v40 = vpack.c.b16 %v34, %v34
  %v41 = vpack.c.b16 %v35, %v35
  %v42 = vpack.c.b16 %v36, %v36
  %v43 = vpack.c.b16 %v37, %v37
  %v44 = vpack.c.b16 %v38, %v38
  %v45 = vpack.c.b16 %v39, %v39
  %46 = vrot.lane.b32.xlu0 %v40, 127
  %v47 = vpop.permute.xlu0 %46
  %48 = vrot.lane.b32.xlu0 %v41, 127
  %v49 = vpop.permute.xlu0 %48
  %50 = vrot.lane.b32.xlu0 %v42, 127
  %v51 = vpop.permute.xlu0 %50
  %52 = vrot.lane.b32.xlu0 %v43, 127
  %v53 = vpop.permute.xlu0 %52
  %54 = vrot.lane.b32.xlu0 %v44, 127
  %v55 = vpop.permute.xlu0 %54
  %56 = vrot.lane.b32.xlu0 %v45, 127
  %v57 = vpop.permute.xlu0 %56
  %vm58 = vcmask 1039360
  %v59 = vsel %vm58, %v47, %v49
  %v60 = vsel %vm58, %v49, %v51
  %v61 = vsel %vm58, %v51, %v53
  %v62 = vsel %vm58, %v53, %v55
  %v63 = vsel %vm58, %v55, %v57
  %vm64 = vcmask 64512
  %v66 = vsel %vm64, %v30, 0
  %vm68 = vcmask 1043456
  %v70 = vsel %vm68, %v59, 0
  %v73 = vsel %vm68, %v60, 0
  %v76 = vsel %vm68, %v61, 0
  %v79 = vsel %vm68, %v62, 0
  %v82 = vsel %vm68, %v63, 0
  %v85 = vsel %vm68, %v57, 0
  %87 = vmatprep.subr.bf16.mxu0 0
  %88 = vmatpush1.bf16.msra.mxu0 0
  %89 = vmatprep.subr.bf16.mxu0 0
  %90 = vmatpush1.bf16.msra.mxu0 0
  %91 = vmatprep.subr.bf16.mxu0 0
  %92 = vmatpush1.bf16.msra.mxu0 0
  %93 = vmatprep.subr.bf16.mxu0 0
  %94 = vmatpush1.bf16.msra.mxu0 0
  %95 = vmatprep.subr.bf16.mxu0 0
  %96 = vmatpush1.bf16.msra.mxu0 0
  %97 = vmatprep.subr.bf16.mxu0 0
  %98 = vmatpush1.bf16.msra.mxu0 0
  %99 = vmatprep.subr.bf16.mxu0 0
  %100 = vmatpush1.bf16.msra.mxu0 0
  %101 = vmatprep.subr.bf16.mxu0 %v73
  %102 = vmatpush1.bf16.msra.mxu0 %v70
  %103 = vmatprep.subr.bf16.mxu0 0
  %104 = vmatpush2.bf16.msra.mxu0 0
  %105 = vmatprep.subr.bf16.mxu0 0
  %106 = vmatpush2.bf16.msra.mxu0 0
  %107 = vmatprep.subr.bf16.mxu0 0
  %108 = vmatpush2.bf16.msra.mxu0 0
  %109 = vmatprep.subr.bf16.mxu0 0
  %110 = vmatpush2.bf16.msra.mxu0 0
  %111 = vmatprep.subr.bf16.mxu0 0
  %112 = vmatpush2.bf16.msra.mxu0 0
  %113 = vmatprep.subr.bf16.mxu0 0
  %114 = vmatpush2.bf16.msra.mxu0 0
  %115 = vmatprep.subr.bf16.mxu0 0
  %116 = vmatpush2.bf16.msra.mxu0 0
  %117 = vmatprep.subr.bf16.mxu0 0
  %118 = vmatpush2.bf16.msra.mxu0 0
  %119 = vmatprep.mubr.bf16.mxu0 0
  %120 = vmatmul.mubr.bf16.gmra.mxu0 %v66
  %v121 = vpop.f32.mrf.mxu0
  %v122 = vadd.f32 0.0, %v121
  %v123 = vpop.f32.mrf.mxu0
  %v124 = vadd.f32 0.0, %v123
  %v125 = vpop.f32.mrf.mxu0
  %v126 = vadd.f32 0.0, %v125
  %v127 = vpop.f32.mrf.mxu0
  %v128 = vadd.f32 0.0, %v127
  %129 = vdwg.mxu0
  %130 = vmatprep.subr.bf16.mxu0 0
  %131 = vmatpush1.bf16.msra.mxu0 0
  %132 = vmatprep.subr.bf16.mxu0 0
  %133 = vmatpush1.bf16.msra.mxu0 0
  %134 = vmatprep.subr.bf16.mxu0 0
  %135 = vmatpush1.bf16.msra.mxu0 0
  %136 = vmatprep.subr.bf16.mxu0 0
  %137 = vmatpush1.bf16.msra.mxu0 0
  %138 = vmatprep.subr.bf16.mxu0 0
  %139 = vmatpush1.bf16.msra.mxu0 0
  %140 = vmatprep.subr.bf16.mxu0 0
  %141 = vmatpush1.bf16.msra.mxu0 0
  %142 = vmatprep.subr.bf16.mxu0 0
  %143 = vmatpush1.bf16.msra.mxu0 0
  %144 = vmatprep.subr.bf16.mxu0 %v79
  %145 = vmatpush1.bf16.msra.mxu0 %v76
  %146 = vmatprep.subr.bf16.mxu0 0
  %147 = vmatpush2.bf16.msra.mxu0 0
  %148 = vmatprep.subr.bf16.mxu0 0
  %149 = vmatpush2.bf16.msra.mxu0 0
  %150 = vmatprep.subr.bf16.mxu0 0
  %151 = vmatpush2.bf16.msra.mxu0 0
  %152 = vmatprep.subr.bf16.mxu0 0
  %153 = vmatpush2.bf16.msra.mxu0 0
  %154 = vmatprep.subr.bf16.mxu0 0
  %155 = vmatpush2.bf16.msra.mxu0 0
  %156 = vmatprep.subr.bf16.mxu0 0
  %157 = vmatpush2.bf16.msra.mxu0 0
  %158 = vmatprep.subr.bf16.mxu0 0
  %159 = vmatpush2.bf16.msra.mxu0 0
  %160 = vmatprep.subr.bf16.mxu0 0
  %161 = vmatpush2.bf16.msra.mxu0 0
  %162 = vmatprep.mubr.bf16.mxu0 0
  %163 = vmatmul.mubr.bf16.gmra.mxu0 %v66
  %v164 = vpop.f32.mrf.mxu0
  %v165 = vadd.f32 0.0, %v164
  %v166 = vpop.f32.mrf.mxu0
  %v167 = vadd.f32 0.0, %v166
  %v168 = vpop.f32.mrf.mxu0
  %v169 = vadd.f32 0.0, %v168
  %v170 = vpop.f32.mrf.mxu0
  %v171 = vadd.f32 0.0, %v170
  %172 = vdwg.mxu0
  %173 = vmatprep.subr.bf16.mxu0 0
  %174 = vmatpush1.bf16.msra.mxu0 0
  %175 = vmatprep.subr.bf16.mxu0 0
  %176 = vmatpush1.bf16.msra.mxu0 0
  %177 = vmatprep.subr.bf16.mxu0 0
  %178 = vmatpush1.bf16.msra.mxu0 0
  %179 = vmatprep.subr.bf16.mxu0 0
  %180 = vmatpush1.bf16.msra.mxu0 0
  %181 = vmatprep.subr.bf16.mxu0 0
  %182 = vmatpush1.bf16.msra.mxu0 0
  %183 = vmatprep.subr.bf16.mxu0 0
  %184 = vmatpush1.bf16.msra.mxu0 0
  %185 = vmatprep.subr.bf16.mxu0 0
  %186 = vmatpush1.bf16.msra.mxu0 0
  %187 = vmatprep.subr.bf16.mxu0 %v85
  %188 = vmatpush1.bf16.msra.mxu0 %v82
  %189 = vmatprep.subr.bf16.mxu0 0
  %190 = vmatpush2.bf16.msra.mxu0 0
  %191 = vmatprep.subr.bf16.mxu0 0
  %192 = vmatpush2.bf16.msra.mxu0 0
  %193 = vmatprep.subr.bf16.mxu0 0
  %194 = vmatpush2.bf16.msra.mxu0 0
  %195 = vmatprep.subr.bf16.mxu0 0
  %196 = vmatpush2.bf16.msra.mxu0 0
  %197 = vmatprep.subr.bf16.mxu0 0
  %198 = vmatpush2.bf16.msra.mxu0 0
  %199 = vmatprep.subr.bf16.mxu0 0
  %200 = vmatpush2.bf16.msra.mxu0 0
  %201 = vmatprep.subr.bf16.mxu0 0
  %202 = vmatpush2.bf16.msra.mxu0 0
  %203 = vmatprep.subr.bf16.mxu0 0
  %204 = vmatpush2.bf16.msra.mxu0 0
  %205 = vmatprep.mubr.bf16.mxu0 0
  %206 = vmatmul.mubr.bf16.gmra.mxu0 %v66
  %v207 = vpop.f32.mrf.mxu0
  %v208 = vadd.f32 0.0, %v207
  %v209 = vpop.f32.mrf.mxu0
  %v210 = vadd.f32 0.0, %v209
  %v211 = vpop.f32.mrf.mxu0
  %v212 = vadd.f32 0.0, %v211
  %v213 = vpop.f32.mrf.mxu0
  %v214 = vadd.f32 0.0, %v213
  %215 = vdwg.mxu0
  %v218 = vunpack.c.l.b16 %v21
  %v219 = vunpack.c.l.b16 %v22
  %v220 = vpack.c.b16 %v219, %v218
  %v222 = vsel %vm64, %v220, 0
  %v225 = vsel %vm68, %v40, 0
  %v228 = vsel %vm68, %v41, 0
  %v231 = vsel %vm68, %v42, 0
  %v234 = vsel %vm68, %v43, 0
  %v237 = vsel %vm68, %v44, 0
  %v240 = vsel %vm68, %v45, 0
  %242 = vmatprep.subr.bf16.mxu0 0
  %243 = vmatpush1.bf16.msra.mxu0 0
  %244 = vmatprep.subr.bf16.mxu0 0
  %245 = vmatpush1.bf16.msra.mxu0 0
  %246 = vmatprep.subr.bf16.mxu0 0
  %247 = vmatpush1.bf16.msra.mxu0 0
  %248 = vmatprep.subr.bf16.mxu0 0
  %249 = vmatpush1.bf16.msra.mxu0 0
  %250 = vmatprep.subr.bf16.mxu0 0
  %251 = vmatpush1.bf16.msra.mxu0 0
  %252 = vmatprep.subr.bf16.mxu0 0
  %253 = vmatpush1.bf16.msra.mxu0 0
  %254 = vmatprep.subr.bf16.mxu0 0
  %255 = vmatpush1.bf16.msra.mxu0 0
  %256 = vmatprep.subr.bf16.mxu0 %v228
  %257 = vmatpush1.bf16.msra.mxu0 %v225
  %258 = vmatprep.subr.bf16.mxu0 0
  %259 = vmatpush2.bf16.msra.mxu0 0
  %260 = vmatprep.subr.bf16.mxu0 0
  %261 = vmatpush2.bf16.msra.mxu0 0
  %262 = vmatprep.subr.bf16.mxu0 0
  %263 = vmatpush2.bf16.msra.mxu0 0
  %264 = vmatprep.subr.bf16.mxu0 0
  %265 = vmatpush2.bf16.msra.mxu0 0
  %266 = vmatprep.subr.bf16.mxu0 0
  %267 = vmatpush2.bf16.msra.mxu0 0
  %268 = vmatprep.subr.bf16.mxu0 0
  %269 = vmatpush2.bf16.msra.mxu0 0
  %270 = vmatprep.subr.bf16.mxu0 0
  %271 = vmatpush2.bf16.msra.mxu0 0
  %272 = vmatprep.subr.bf16.mxu0 0
  %273 = vmatpush2.bf16.msra.mxu0 0
  %274 = vmatprep.mubr.bf16.mxu0 0
  %275 = vmatmul.mubr.bf16.gmra.mxu0 %v222
  %v276 = vpop.f32.mrf.mxu0
  %v277 = vadd.f32 %v122, %v276
  %v278 = vpop.f32.mrf.mxu0
  %v279 = vadd.f32 %v124, %v278
  %v280 = vpop.f32.mrf.mxu0
  %v281 = vadd.f32 %v126, %v280
  %v282 = vpop.f32.mrf.mxu0
  %v283 = vadd.f32 %v128, %v282
  %284 = vdwg.mxu0
  %285 = vmatprep.subr.bf16.mxu0 0
  %286 = vmatpush1.bf16.msra.mxu0 0
  %287 = vmatprep.subr.bf16.mxu0 0
  %288 = vmatpush1.bf16.msra.mxu0 0
  %289 = vmatprep.subr.bf16.mxu0 0
  %290 = vmatpush1.bf16.msra.mxu0 0
  %291 = vmatprep.subr.bf16.mxu0 0
  %292 = vmatpush1.bf16.msra.mxu0 0
  %293 = vmatprep.subr.bf16.mxu0 0
  %294 = vmatpush1.bf16.msra.mxu0 0
  %295 = vmatprep.subr.bf16.mxu0 0
  %296 = vmatpush1.bf16.msra.mxu0 0
  %297 = vmatprep.subr.bf16.mxu0 0
  %298 = vmatpush1.bf16.msra.mxu0 0
  %299 = vmatprep.subr.bf16.mxu0 %v234
  %300 = vmatpush1.bf16.msra.mxu0 %v231
  %301 = vmatprep.subr.bf16.mxu0 0
  %302 = vmatpush2.bf16.msra.mxu0 0
  %303 = vmatprep.subr.bf16.mxu0 0
  %304 = vmatpush2.bf16.msra.mxu0 0
  %305 = vmatprep.subr.bf16.mxu0 0
  %306 = vmatpush2.bf16.msra.mxu0 0
  %307 = vmatprep.subr.bf16.mxu0 0
  %308 = vmatpush2.bf16.msra.mxu0 0
  %309 = vmatprep.subr.bf16.mxu0 0
  %310 = vmatpush2.bf16.msra.mxu0 0
  %311 = vmatprep.subr.bf16.mxu0 0
  %312 = vmatpush2.bf16.msra.mxu0 0
  %313 = vmatprep.subr.bf16.mxu0 0
  %314 = vmatpush2.bf16.msra.mxu0 0
  %315 = vmatprep.subr.bf16.mxu0 0
  %316 = vmatpush2.bf16.msra.mxu0 0
  %317 = vmatprep.mubr.bf16.mxu0 0
  %318 = vmatmul.mubr.bf16.gmra.mxu0 %v222
  %v319 = vpop.f32.mrf.mxu0
  %v320 = vadd.f32 %v165, %v319
  %v321 = vpop.f32.mrf.mxu0
  %v322 = vadd.f32 %v167, %v321
  %v323 = vpop.f32.mrf.mxu0
  %v324 = vadd.f32 %v169, %v323
  %v325 = vpop.f32.mrf.mxu0
  %v326 = vadd.f32 %v171, %v325
  %327 = vdwg.mxu0
  %328 = vmatprep.subr.bf16.mxu0 0
  %329 = vmatpush1.bf16.msra.mxu0 0
  %330 = vmatprep.subr.bf16.mxu0 0
  %331 = vmatpush1.bf16.msra.mxu0 0
  %332 = vmatprep.subr.bf16.mxu0 0
  %333 = vmatpush1.bf16.msra.mxu0 0
  %334 = vmatprep.subr.bf16.mxu0 0
  %335 = vmatpush1.bf16.msra.mxu0 0
  %336 = vmatprep.subr.bf16.mxu0 0
  %337 = vmatpush1.bf16.msra.mxu0 0
  %338 = vmatprep.subr.bf16.mxu0 0
  %339 = vmatpush1.bf16.msra.mxu0 0
  %340 = vmatprep.subr.bf16.mxu0 0
  %341 = vmatpush1.bf16.msra.mxu0 0
  %342 = vmatprep.subr.bf16.mxu0 %v240
  %343 = vmatpush1.bf16.msra.mxu0 %v237
  %344 = vmatprep.subr.bf16.mxu0 0
  %345 = vmatpush2.bf16.msra.mxu0 0
  %346 = vmatprep.subr.bf16.mxu0 0
  %347 = vmatpush2.bf16.msra.mxu0 0
  %348 = vmatprep.subr.bf16.mxu0 0
  %349 = vmatpush2.bf16.msra.mxu0 0
  %350 = vmatprep.subr.bf16.mxu0 0
  %351 = vmatpush2.bf16.msra.mxu0 0
  %352 = vmatprep.subr.bf16.mxu0 0
  %353 = vmatpush2.bf16.msra.mxu0 0
  %354 = vmatprep.subr.bf16.mxu0 0
  %355 = vmatpush2.bf16.msra.mxu0 0
  %356 = vmatprep.subr.bf16.mxu0 0
  %357 = vmatpush2.bf16.msra.mxu0 0
  %358 = vmatprep.subr.bf16.mxu0 0
  %359 = vmatpush2.bf16.msra.mxu0 0
  %360 = vmatprep.mubr.bf16.mxu0 0
  %361 = vmatmul.mubr.bf16.gmra.mxu0 %v222
  %v362 = vpop.f32.mrf.mxu0
  %v363 = vadd.f32 %v208, %v362
  %v364 = vpop.f32.mrf.mxu0
  %v365 = vadd.f32 %v210, %v364
  %v366 = vpop.f32.mrf.mxu0
  %v367 = vadd.f32 %v212, %v366
  %v368 = vpop.f32.mrf.mxu0
  %v369 = vadd.f32 %v214, %v368
  %370 = vdwg.mxu0
  %s371 = scalar_lea.vmem %s1, 16
  %v372 = vld [vmem:[%s371] sm:$0xf]
  %v373 = vld [vmem:[%s371 + $0x4] sm:$0xf]
  %v376 = vunpack.c.l.b16 %v372
  %v377 = vunpack.c.l.b16 %v373
  %v378 = vpack.c.b16 %v377, %v376
  %379 = vrot.lane.b32.xlu0 %v40, 126
  %v380 = vpop.permute.xlu0 %379
  %381 = vrot.lane.b32.xlu0 %v41, 126
  %v382 = vpop.permute.xlu0 %381
  %383 = vrot.lane.b32.xlu0 %v42, 126
  %v384 = vpop.permute.xlu0 %383
  %385 = vrot.lane.b32.xlu0 %v43, 126
  %v386 = vpop.permute.xlu0 %385
  %387 = vrot.lane.b32.xlu0 %v44, 126
  %v388 = vpop.permute.xlu0 %387
  %389 = vrot.lane.b32.xlu0 %v45, 126
  %v390 = vpop.permute.xlu0 %389
  %vm391 = vcmask 1031168
  %v392 = vsel %vm391, %v380, %v382
  %v393 = vsel %vm391, %v382, %v384
  %v394 = vsel %vm391, %v384, %v386
  %v395 = vsel %vm391, %v386, %v388
  %v396 = vsel %vm391, %v388, %v390
  %v398 = vsel %vm64, %v378, 0
  %v401 = vsel %vm68, %v392, 0
  %v404 = vsel %vm68, %v393, 0
  %v407 = vsel %vm68, %v394, 0
  %v410 = vsel %vm68, %v395, 0
  %v413 = vsel %vm68, %v396, 0
  %v416 = vsel %vm68, %v390, 0
  %418 = vmatprep.subr.bf16.mxu0 0
  %419 = vmatpush1.bf16.msra.mxu0 0
  %420 = vmatprep.subr.bf16.mxu0 0
  %421 = vmatpush1.bf16.msra.mxu0 0
  %422 = vmatprep.subr.bf16.mxu0 0
  %423 = vmatpush1.bf16.msra.mxu0 0
  %424 = vmatprep.subr.bf16.mxu0 0
  %425 = vmatpush1.bf16.msra.mxu0 0
  %426 = vmatprep.subr.bf16.mxu0 0
  %427 = vmatpush1.bf16.msra.mxu0 0
  %428 = vmatprep.subr.bf16.mxu0 0
  %429 = vmatpush1.bf16.msra.mxu0 0
  %430 = vmatprep.subr.bf16.mxu0 0
  %431 = vmatpush1.bf16.msra.mxu0 0
  %432 = vmatprep.subr.bf16.mxu0 %v404
  %433 = vmatpush1.bf16.msra.mxu0 %v401
  %434 = vmatprep.subr.bf16.mxu0 0
  %435 = vmatpush2.bf16.msra.mxu0 0
  %436 = vmatprep.subr.bf16.mxu0 0
  %437 = vmatpush2.bf16.msra.mxu0 0
  %438 = vmatprep.subr.bf16.mxu0 0
  %439 = vmatpush2.bf16.msra.mxu0 0
  %440 = vmatprep.subr.bf16.mxu0 0
  %441 = vmatpush2.bf16.msra.mxu0 0
  %442 = vmatprep.subr.bf16.mxu0 0
  %443 = vmatpush2.bf16.msra.mxu0 0
  %444 = vmatprep.subr.bf16.mxu0 0
  %445 = vmatpush2.bf16.msra.mxu0 0
  %446 = vmatprep.subr.bf16.mxu0 0
  %447 = vmatpush2.bf16.msra.mxu0 0
  %448 = vmatprep.subr.bf16.mxu0 0
  %449 = vmatpush2.bf16.msra.mxu0 0
  %450 = vmatprep.mubr.bf16.mxu0 0
  %451 = vmatmul.mubr.bf16.gmra.mxu0 %v398
  %v452 = vpop.f32.mrf.mxu0
  %v453 = vadd.f32 0.0, %v452
  %v454 = vpop.f32.mrf.mxu0
  %v455 = vadd.f32 0.0, %v454
  %v456 = vpop.f32.mrf.mxu0
  %v457 = vadd.f32 0.0, %v456
  %v458 = vpop.f32.mrf.mxu0
  %v459 = vadd.f32 0.0, %v458
  %460 = vdwg.mxu0
  %461 = vmatprep.subr.bf16.mxu0 0
  %462 = vmatpush1.bf16.msra.mxu0 0
  %463 = vmatprep.subr.bf16.mxu0 0
  %464 = vmatpush1.bf16.msra.mxu0 0
  %465 = vmatprep.subr.bf16.mxu0 0
  %466 = vmatpush1.bf16.msra.mxu0 0
  %467 = vmatprep.subr.bf16.mxu0 0
  %468 = vmatpush1.bf16.msra.mxu0 0
  %469 = vmatprep.subr.bf16.mxu0 0
  %470 = vmatpush1.bf16.msra.mxu0 0
  %471 = vmatprep.subr.bf16.mxu0 0
  %472 = vmatpush1.bf16.msra.mxu0 0
  %473 = vmatprep.subr.bf16.mxu0 0
  %474 = vmatpush1.bf16.msra.mxu0 0
  %475 = vmatprep.subr.bf16.mxu0 %v410
  %476 = vmatpush1.bf16.msra.mxu0 %v407
  %477 = vmatprep.subr.bf16.mxu0 0
  %478 = vmatpush2.bf16.msra.mxu0 0
  %479 = vmatprep.subr.bf16.mxu0 0
  %480 = vmatpush2.bf16.msra.mxu0 0
  %481 = vmatprep.subr.bf16.mxu0 0
  %482 = vmatpush2.bf16.msra.mxu0 0
  %483 = vmatprep.subr.bf16.mxu0 0
  %484 = vmatpush2.bf16.msra.mxu0 0
  %485 = vmatprep.subr.bf16.mxu0 0
  %486 = vmatpush2.bf16.msra.mxu0 0
  %487 = vmatprep.subr.bf16.mxu0 0
  %488 = vmatpush2.bf16.msra.mxu0 0
  %489 = vmatprep.subr.bf16.mxu0 0
  %490 = vmatpush2.bf16.msra.mxu0 0
  %491 = vmatprep.subr.bf16.mxu0 0
  %492 = vmatpush2.bf16.msra.mxu0 0
  %493 = vmatprep.mubr.bf16.mxu0 0
  %494 = vmatmul.mubr.bf16.gmra.mxu0 %v398
  %v495 = vpop.f32.mrf.mxu0
  %v496 = vadd.f32 0.0, %v495
  %v497 = vpop.f32.mrf.mxu0
  %v498 = vadd.f32 0.0, %v497
  %v499 = vpop.f32.mrf.mxu0
  %v500 = vadd.f32 0.0, %v499
  %v501 = vpop.f32.mrf.mxu0
  %v502 = vadd.f32 0.0, %v501
  %503 = vdwg.mxu0
  %504 = vmatprep.subr.bf16.mxu0 0
  %505 = vmatpush1.bf16.msra.mxu0 0
  %506 = vmatprep.subr.bf16.mxu0 0
  %507 = vmatpush1.bf16.msra.mxu0 0
  %508 = vmatprep.subr.bf16.mxu0 0
  %509 = vmatpush1.bf16.msra.mxu0 0
  %510 = vmatprep.subr.bf16.mxu0 0
  %511 = vmatpush1.bf16.msra.mxu0 0
  %512 = vmatprep.subr.bf16.mxu0 0
  %513 = vmatpush1.bf16.msra.mxu0 0
  %514 = vmatprep.subr.bf16.mxu0 0
  %515 = vmatpush1.bf16.msra.mxu0 0
  %516 = vmatprep.subr.bf16.mxu0 0
  %517 = vmatpush1.bf16.msra.mxu0 0
  %518 = vmatprep.subr.bf16.mxu0 %v416
  %519 = vmatpush1.bf16.msra.mxu0 %v413
  %520 = vmatprep.subr.bf16.mxu0 0
  %521 = vmatpush2.bf16.msra.mxu0 0
  %522 = vmatprep.subr.bf16.mxu0 0
  %523 = vmatpush2.bf16.msra.mxu0 0
  %524 = vmatprep.subr.bf16.mxu0 0
  %525 = vmatpush2.bf16.msra.mxu0 0
  %526 = vmatprep.subr.bf16.mxu0 0
  %527 = vmatpush2.bf16.msra.mxu0 0
  %528 = vmatprep.subr.bf16.mxu0 0
  %529 = vmatpush2.bf16.msra.mxu0 0
  %530 = vmatprep.subr.bf16.mxu0 0
  %531 = vmatpush2.bf16.msra.mxu0 0
  %532 = vmatprep.subr.bf16.mxu0 0
  %533 = vmatpush2.bf16.msra.mxu0 0
  %534 = vmatprep.subr.bf16.mxu0 0
  %535 = vmatpush2.bf16.msra.mxu0 0
  %536 = vmatprep.mubr.bf16.mxu0 0
  %537 = vmatmul.mubr.bf16.gmra.mxu0 %v398
  %v538 = vpop.f32.mrf.mxu0
  %v539 = vadd.f32 0.0, %v538
  %v540 = vpop.f32.mrf.mxu0
  %v541 = vadd.f32 0.0, %v540
  %v542 = vpop.f32.mrf.mxu0
  %v543 = vadd.f32 0.0, %v542
  %v544 = vpop.f32.mrf.mxu0
  %v545 = vadd.f32 0.0, %v544
  %546 = vdwg.mxu0
  %v547 = vadd.f32 %v277, %v453
  %v548 = vadd.f32 %v279, %v455
  %v549 = vadd.f32 %v320, %v496
  %v550 = vadd.f32 %v322, %v498
  %v551 = vadd.f32 %v363, %v539
  %v552 = vadd.f32 %v365, %v541
  %v553 = vadd.f32 %v281, %v457
  %v554 = vadd.f32 %v283, %v459
  %v555 = vadd.f32 %v324, %v500
  %v556 = vadd.f32 %v326, %v502
  %v557 = vadd.f32 %v367, %v543
  %v558 = vadd.f32 %v369, %v545
  %s559 = scalar_lea.vmem %s1, 24
  %v560 = vld [vmem:[%s559] sm:$0xf]
  %v561 = vld [vmem:[%s559 + $0x4] sm:$0xf]
  %v564 = vunpack.c.l.b16 %v560
  %v565 = vunpack.c.l.b16 %v561
  %v566 = vpack.c.b16 %v565, %v564
  %567 = vrot.lane.b32.xlu0 %v40, 110
  %v568 = vpop.permute.xlu0 %567
  %569 = vrot.lane.b32.xlu0 %v41, 110
  %v570 = vpop.permute.xlu0 %569
  %571 = vrot.lane.b32.xlu0 %v42, 110
  %v572 = vpop.permute.xlu0 %571
  %573 = vrot.lane.b32.xlu0 %v43, 110
  %v574 = vpop.permute.xlu0 %573
  %575 = vrot.lane.b32.xlu0 %v44, 110
  %v576 = vpop.permute.xlu0 %575
  %577 = vrot.lane.b32.xlu0 %v45, 110
  %v578 = vpop.permute.xlu0 %577
  %vm579 = vcmask 900096
  %v580 = vsel %vm579, %v568, %v570
  %v581 = vsel %vm579, %v570, %v572
  %v582 = vsel %vm579, %v572, %v574
  %v583 = vsel %vm579, %v574, %v576
  %v584 = vsel %vm579, %v576, %v578
  %v586 = vsel %vm64, %v566, 0
  %v589 = vsel %vm68, %v580, 0
  %v592 = vsel %vm68, %v581, 0
  %v595 = vsel %vm68, %v582, 0
  %v598 = vsel %vm68, %v583, 0
  %v601 = vsel %vm68, %v584, 0
  %v604 = vsel %vm68, %v578, 0
  %606 = vmatprep.subr.bf16.mxu0 0
  %607 = vmatpush1.bf16.msra.mxu0 0
  %608 = vmatprep.subr.bf16.mxu0 0
  %609 = vmatpush1.bf16.msra.mxu0 0
  %610 = vmatprep.subr.bf16.mxu0 0
  %611 = vmatpush1.bf16.msra.mxu0 0
  %612 = vmatprep.subr.bf16.mxu0 0
  %613 = vmatpush1.bf16.msra.mxu0 0
  %614 = vmatprep.subr.bf16.mxu0 0
  %615 = vmatpush1.bf16.msra.mxu0 0
  %616 = vmatprep.subr.bf16.mxu0 0
  %617 = vmatpush1.bf16.msra.mxu0 0
  %618 = vmatprep.subr.bf16.mxu0 0
  %619 = vmatpush1.bf16.msra.mxu0 0
  %620 = vmatprep.subr.bf16.mxu0 %v592
  %621 = vmatpush1.bf16.msra.mxu0 %v589
  %622 = vmatprep.subr.bf16.mxu0 0
  %623 = vmatpush2.bf16.msra.mxu0 0
  %624 = vmatprep.subr.bf16.mxu0 0
  %625 = vmatpush2.bf16.msra.mxu0 0
  %626 = vmatprep.subr.bf16.mxu0 0
  %627 = vmatpush2.bf16.msra.mxu0 0
  %628 = vmatprep.subr.bf16.mxu0 0
  %629 = vmatpush2.bf16.msra.mxu0 0
  %630 = vmatprep.subr.bf16.mxu0 0
  %631 = vmatpush2.bf16.msra.mxu0 0
  %632 = vmatprep.subr.bf16.mxu0 0
  %633 = vmatpush2.bf16.msra.mxu0 0
  %634 = vmatprep.subr.bf16.mxu0 0
  %635 = vmatpush2.bf16.msra.mxu0 0
  %636 = vmatprep.subr.bf16.mxu0 0
  %637 = vmatpush2.bf16.msra.mxu0 0
  %638 = vmatprep.mubr.bf16.mxu0 0
  %639 = vmatmul.mubr.bf16.gmra.mxu0 %v586
  %v640 = vpop.f32.mrf.mxu0
  %v641 = vadd.f32 0.0, %v640
  %v642 = vpop.f32.mrf.mxu0
  %v643 = vadd.f32 0.0, %v642
  %v644 = vpop.f32.mrf.mxu0
  %v645 = vadd.f32 0.0, %v644
  %v646 = vpop.f32.mrf.mxu0
  %v647 = vadd.f32 0.0, %v646
  %648 = vdwg.mxu0
  %649 = vmatprep.subr.bf16.mxu0 0
  %650 = vmatpush1.bf16.msra.mxu0 0
  %651 = vmatprep.subr.bf16.mxu0 0
  %652 = vmatpush1.bf16.msra.mxu0 0
  %653 = vmatprep.subr.bf16.mxu0 0
  %654 = vmatpush1.bf16.msra.mxu0 0
  %655 = vmatprep.subr.bf16.mxu0 0
  %656 = vmatpush1.bf16.msra.mxu0 0
  %657 = vmatprep.subr.bf16.mxu0 0
  %658 = vmatpush1.bf16.msra.mxu0 0
  %659 = vmatprep.subr.bf16.mxu0 0
  %660 = vmatpush1.bf16.msra.mxu0 0
  %661 = vmatprep.subr.bf16.mxu0 0
  %662 = vmatpush1.bf16.msra.mxu0 0
  %663 = vmatprep.subr.bf16.mxu0 %v598
  %664 = vmatpush1.bf16.msra.mxu0 %v595
  %665 = vmatprep.subr.bf16.mxu0 0
  %666 = vmatpush2.bf16.msra.mxu0 0
  %667 = vmatprep.subr.bf16.mxu0 0
  %668 = vmatpush2.bf16.msra.mxu0 0
  %669 = vmatprep.subr.bf16.mxu0 0
  %670 = vmatpush2.bf16.msra.mxu0 0
  %671 = vmatprep.subr.bf16.mxu0 0
  %672 = vmatpush2.bf16.msra.mxu0 0
  %673 = vmatprep.subr.bf16.mxu0 0
  %674 = vmatpush2.bf16.msra.mxu0 0
  %675 = vmatprep.subr.bf16.mxu0 0
  %676 = vmatpush2.bf16.msra.mxu0 0
  %677 = vmatprep.subr.bf16.mxu0 0
  %678 = vmatpush2.bf16.msra.mxu0 0
  %679 = vmatprep.subr.bf16.mxu0 0
  %680 = vmatpush2.bf16.msra.mxu0 0
  %681 = vmatprep.mubr.bf16.mxu0 0
  %682 = vmatmul.mubr.bf16.gmra.mxu0 %v586
  %v683 = vpop.f32.mrf.mxu0
  %v684 = vadd.f32 0.0, %v683
  %v685 = vpop.f32.mrf.mxu0
  %v686 = vadd.f32 0.0, %v685
  %v687 = vpop.f32.mrf.mxu0
  %v688 = vadd.f32 0.0, %v687
  %v689 = vpop.f32.mrf.mxu0
  %v690 = vadd.f32 0.0, %v689
  %691 = vdwg.mxu0
  %692 = vmatprep.subr.bf16.mxu0 0
  %693 = vmatpush1.bf16.msra.mxu0 0
  %694 = vmatprep.subr.bf16.mxu0 0
  %695 = vmatpush1.bf16.msra.mxu0 0
  %696 = vmatprep.subr.bf16.mxu0 0
  %697 = vmatpush1.bf16.msra.mxu0 0
  %698 = vmatprep.subr.bf16.mxu0 0
  %699 = vmatpush1.bf16.msra.mxu0 0
  %700 = vmatprep.subr.bf16.mxu0 0
  %701 = vmatpush1.bf16.msra.mxu0 0
  %702 = vmatprep.subr.bf16.mxu0 0
  %703 = vmatpush1.bf16.msra.mxu0 0
  %704 = vmatprep.subr.bf16.mxu0 0
  %705 = vmatpush1.bf16.msra.mxu0 0
  %706 = vmatprep.subr.bf16.mxu0 %v604
  %707 = vmatpush1.bf16.msra.mxu0 %v601
  %708 = vmatprep.subr.bf16.mxu0 0
  %709 = vmatpush2.bf16.msra.mxu0 0
  %710 = vmatprep.subr.bf16.mxu0 0
  %711 = vmatpush2.bf16.msra.mxu0 0
  %712 = vmatprep.subr.bf16.mxu0 0
  %713 = vmatpush2.bf16.msra.mxu0 0
  %714 = vmatprep.subr.bf16.mxu0 0
  %715 = vmatpush2.bf16.msra.mxu0 0
  %716 = vmatprep.subr.bf16.mxu0 0
  %717 = vmatpush2.bf16.msra.mxu0 0
  %718 = vmatprep.subr.bf16.mxu0 0
  %719 = vmatpush2.bf16.msra.mxu0 0
  %720 = vmatprep.subr.bf16.mxu0 0
  %721 = vmatpush2.bf16.msra.mxu0 0
  %722 = vmatprep.subr.bf16.mxu0 0
  %723 = vmatpush2.bf16.msra.mxu0 0
  %724 = vmatprep.mubr.bf16.mxu0 0
  %725 = vmatmul.mubr.bf16.gmra.mxu0 %v586
  %v726 = vpop.f32.mrf.mxu0
  %v727 = vadd.f32 0.0, %v726
  %v728 = vpop.f32.mrf.mxu0
  %v729 = vadd.f32 0.0, %v728
  %v730 = vpop.f32.mrf.mxu0
  %v731 = vadd.f32 0.0, %v730
  %v732 = vpop.f32.mrf.mxu0
  %v733 = vadd.f32 0.0, %v732
  %734 = vdwg.mxu0
  %v735 = vadd.f32 %v547, %v641
  %v736 = vadd.f32 %v548, %v643
  %v737 = vadd.f32 %v549, %v684
  %v738 = vadd.f32 %v550, %v686
  %v739 = vadd.f32 %v551, %v727
  %v740 = vadd.f32 %v552, %v729
  %v741 = vadd.f32 %v553, %v645
  %v742 = vadd.f32 %v554, %v647
  %v743 = vadd.f32 %v555, %v688
  %v744 = vadd.f32 %v556, %v690
  %v745 = vadd.f32 %v557, %v731
  %v746 = vadd.f32 %v558, %v733
  %s747 = scalar_lea.vmem %s1, 32
  %v748 = vld [vmem:[%s747] sm:$0xf]
  %v749 = vld [vmem:[%s747 + $0x4] sm:$0xf]
  %v752 = vunpack.c.l.b16 %v748
  %v753 = vunpack.c.l.b16 %v749
  %v754 = vpack.c.b16 %v753, %v752
  %755 = vrot.lane.b32.xlu0 %v40, 109
  %v756 = vpop.permute.xlu0 %755
  %757 = vrot.lane.b32.xlu0 %v41, 109
  %v758 = vpop.permute.xlu0 %757
  %759 = vrot.lane.b32.xlu0 %v42, 109
  %v760 = vpop.permute.xlu0 %759
  %761 = vrot.lane.b32.xlu0 %v43, 109
  %v762 = vpop.permute.xlu0 %761
  %763 = vrot.lane.b32.xlu0 %v44, 109
  %v764 = vpop.permute.xlu0 %763
  %765 = vrot.lane.b32.xlu0 %v45, 109
  %v766 = vpop.permute.xlu0 %765
  %vm767 = vcmask 891904
  %v768 = vsel %vm767, %v756, %v758
  %v769 = vsel %vm767, %v758, %v760
  %v770 = vsel %vm767, %v760, %v762
  %v771 = vsel %vm767, %v762, %v764
  %v772 = vsel %vm767, %v764, %v766
  %v774 = vsel %vm64, %v754, 0
  %v777 = vsel %vm68, %v768, 0
  %v780 = vsel %vm68, %v769, 0
  %v783 = vsel %vm68, %v770, 0
  %v786 = vsel %vm68, %v771, 0
  %v789 = vsel %vm68, %v772, 0
  %v792 = vsel %vm68, %v766, 0
  %794 = vmatprep.subr.bf16.mxu0 0
  %795 = vmatpush1.bf16.msra.mxu0 0
  %796 = vmatprep.subr.bf16.mxu0 0
  %797 = vmatpush1.bf16.msra.mxu0 0
  %798 = vmatprep.subr.bf16.mxu0 0
  %799 = vmatpush1.bf16.msra.mxu0 0
  %800 = vmatprep.subr.bf16.mxu0 0
  %801 = vmatpush1.bf16.msra.mxu0 0
  %802 = vmatprep.subr.bf16.mxu0 0
  %803 = vmatpush1.bf16.msra.mxu0 0
  %804 = vmatprep.subr.bf16.mxu0 0
  %805 = vmatpush1.bf16.msra.mxu0 0
  %806 = vmatprep.subr.bf16.mxu0 0
  %807 = vmatpush1.bf16.msra.mxu0 0
  %808 = vmatprep.subr.bf16.mxu0 %v780
  %809 = vmatpush1.bf16.msra.mxu0 %v777
  %810 = vmatprep.subr.bf16.mxu0 0
  %811 = vmatpush2.bf16.msra.mxu0 0
  %812 = vmatprep.subr.bf16.mxu0 0
  %813 = vmatpush2.bf16.msra.mxu0 0
  %814 = vmatprep.subr.bf16.mxu0 0
  %815 = vmatpush2.bf16.msra.mxu0 0
  %816 = vmatprep.subr.bf16.mxu0 0
  %817 = vmatpush2.bf16.msra.mxu0 0
  %818 = vmatprep.subr.bf16.mxu0 0
  %819 = vmatpush2.bf16.msra.mxu0 0
  %820 = vmatprep.subr.bf16.mxu0 0
  %821 = vmatpush2.bf16.msra.mxu0 0
  %822 = vmatprep.subr.bf16.mxu0 0
  %823 = vmatpush2.bf16.msra.mxu0 0
  %824 = vmatprep.subr.bf16.mxu0 0
  %825 = vmatpush2.bf16.msra.mxu0 0
  %826 = vmatprep.mubr.bf16.mxu0 0
  %827 = vmatmul.mubr.bf16.gmra.mxu0 %v774
  %v828 = vpop.f32.mrf.mxu0
  %v829 = vadd.f32 0.0, %v828
  %v830 = vpop.f32.mrf.mxu0
  %v831 = vadd.f32 0.0, %v830
  %v832 = vpop.f32.mrf.mxu0
  %v833 = vadd.f32 0.0, %v832
  %v834 = vpop.f32.mrf.mxu0
  %v835 = vadd.f32 0.0, %v834
  %836 = vdwg.mxu0
  %837 = vmatprep.subr.bf16.mxu0 0
  %838 = vmatpush1.bf16.msra.mxu0 0
  %839 = vmatprep.subr.bf16.mxu0 0
  %840 = vmatpush1.bf16.msra.mxu0 0
  %841 = vmatprep.subr.bf16.mxu0 0
  %842 = vmatpush1.bf16.msra.mxu0 0
  %843 = vmatprep.subr.bf16.mxu0 0
  %844 = vmatpush1.bf16.msra.mxu0 0
  %845 = vmatprep.subr.bf16.mxu0 0
  %846 = vmatpush1.bf16.msra.mxu0 0
  %847 = vmatprep.subr.bf16.mxu0 0
  %848 = vmatpush1.bf16.msra.mxu0 0
  %849 = vmatprep.subr.bf16.mxu0 0
  %850 = vmatpush1.bf16.msra.mxu0 0
  %851 = vmatprep.subr.bf16.mxu0 %v786
  %852 = vmatpush1.bf16.msra.mxu0 %v783
  %853 = vmatprep.subr.bf16.mxu0 0
  %854 = vmatpush2.bf16.msra.mxu0 0
  %855 = vmatprep.subr.bf16.mxu0 0
  %856 = vmatpush2.bf16.msra.mxu0 0
  %857 = vmatprep.subr.bf16.mxu0 0
  %858 = vmatpush2.bf16.msra.mxu0 0
  %859 = vmatprep.subr.bf16.mxu0 0
  %860 = vmatpush2.bf16.msra.mxu0 0
  %861 = vmatprep.subr.bf16.mxu0 0
  %862 = vmatpush2.bf16.msra.mxu0 0
  %863 = vmatprep.subr.bf16.mxu0 0
  %864 = vmatpush2.bf16.msra.mxu0 0
  %865 = vmatprep.subr.bf16.mxu0 0
  %866 = vmatpush2.bf16.msra.mxu0 0
  %867 = vmatprep.subr.bf16.mxu0 0
  %868 = vmatpush2.bf16.msra.mxu0 0
  %869 = vmatprep.mubr.bf16.mxu0 0
  %870 = vmatmul.mubr.bf16.gmra.mxu0 %v774
  %v871 = vpop.f32.mrf.mxu0
  %v872 = vadd.f32 0.0, %v871
  %v873 = vpop.f32.mrf.mxu0
  %v874 = vadd.f32 0.0, %v873
  %v875 = vpop.f32.mrf.mxu0
  %v876 = vadd.f32 0.0, %v875
  %v877 = vpop.f32.mrf.mxu0
  %v878 = vadd.f32 0.0, %v877
  %879 = vdwg.mxu0
  %880 = vmatprep.subr.bf16.mxu0 0
  %881 = vmatpush1.bf16.msra.mxu0 0
  %882 = vmatprep.subr.bf16.mxu0 0
  %883 = vmatpush1.bf16.msra.mxu0 0
  %884 = vmatprep.subr.bf16.mxu0 0
  %885 = vmatpush1.bf16.msra.mxu0 0
  %886 = vmatprep.subr.bf16.mxu0 0
  %887 = vmatpush1.bf16.msra.mxu0 0
  %888 = vmatprep.subr.bf16.mxu0 0
  %889 = vmatpush1.bf16.msra.mxu0 0
  %890 = vmatprep.subr.bf16.mxu0 0
  %891 = vmatpush1.bf16.msra.mxu0 0
  %892 = vmatprep.subr.bf16.mxu0 0
  %893 = vmatpush1.bf16.msra.mxu0 0
  %894 = vmatprep.subr.bf16.mxu0 %v792
  %895 = vmatpush1.bf16.msra.mxu0 %v789
  %896 = vmatprep.subr.bf16.mxu0 0
  %897 = vmatpush2.bf16.msra.mxu0 0
  %898 = vmatprep.subr.bf16.mxu0 0
  %899 = vmatpush2.bf16.msra.mxu0 0
  %900 = vmatprep.subr.bf16.mxu0 0
  %901 = vmatpush2.bf16.msra.mxu0 0
  %902 = vmatprep.subr.bf16.mxu0 0
  %903 = vmatpush2.bf16.msra.mxu0 0
  %904 = vmatprep.subr.bf16.mxu0 0
  %905 = vmatpush2.bf16.msra.mxu0 0
  %906 = vmatprep.subr.bf16.mxu0 0
  %907 = vmatpush2.bf16.msra.mxu0 0
  %908 = vmatprep.subr.bf16.mxu0 0
  %909 = vmatpush2.bf16.msra.mxu0 0
  %910 = vmatprep.subr.bf16.mxu0 0
  %911 = vmatpush2.bf16.msra.mxu0 0
  %912 = vmatprep.mubr.bf16.mxu0 0
  %913 = vmatmul.mubr.bf16.gmra.mxu0 %v774
  %v914 = vpop.f32.mrf.mxu0
  %v915 = vadd.f32 0.0, %v914
  %v916 = vpop.f32.mrf.mxu0
  %v917 = vadd.f32 0.0, %v916
  %v918 = vpop.f32.mrf.mxu0
  %v919 = vadd.f32 0.0, %v918
  %v920 = vpop.f32.mrf.mxu0
  %v921 = vadd.f32 0.0, %v920
  %922 = vdwg.mxu0
  %v923 = vadd.f32 %v735, %v829
  %v924 = vadd.f32 %v736, %v831
  %v925 = vadd.f32 %v737, %v872
  %v926 = vadd.f32 %v738, %v874
  %v927 = vadd.f32 %v739, %v915
  %v928 = vadd.f32 %v740, %v917
  %v929 = vadd.f32 %v741, %v833
  %v930 = vadd.f32 %v742, %v835
  %v931 = vadd.f32 %v743, %v876
  %v932 = vadd.f32 %v744, %v878
  %v933 = vadd.f32 %v745, %v919
  %v934 = vadd.f32 %v746, %v921
  %s935 = scalar_lea.vmem %s1, 40
  %v936 = vld [vmem:[%s935] sm:$0xf]
  %v937 = vld [vmem:[%s935 + $0x4] sm:$0xf]
  %v940 = vunpack.c.l.b16 %v936
  %v941 = vunpack.c.l.b16 %v937
  %v942 = vpack.c.b16 %v941, %v940
  %943 = vrot.lane.b32.xlu0 %v40, 108
  %v944 = vpop.permute.xlu0 %943
  %945 = vrot.lane.b32.xlu0 %v41, 108
  %v946 = vpop.permute.xlu0 %945
  %947 = vrot.lane.b32.xlu0 %v42, 108
  %v948 = vpop.permute.xlu0 %947
  %949 = vrot.lane.b32.xlu0 %v43, 108
  %v950 = vpop.permute.xlu0 %949
  %951 = vrot.lane.b32.xlu0 %v44, 108
  %v952 = vpop.permute.xlu0 %951
  %953 = vrot.lane.b32.xlu0 %v45, 108
  %v954 = vpop.permute.xlu0 %953
  %vm955 = vcmask 883712
  %v956 = vsel %vm955, %v944, %v946
  %v957 = vsel %vm955, %v946, %v948
  %v958 = vsel %vm955, %v948, %v950
  %v959 = vsel %vm955, %v950, %v952
  %v960 = vsel %vm955, %v952, %v954
  %v962 = vsel %vm64, %v942, 0
  %v965 = vsel %vm68, %v956, 0
  %v968 = vsel %vm68, %v957, 0
  %v971 = vsel %vm68, %v958, 0
  %v974 = vsel %vm68, %v959, 0
  %v977 = vsel %vm68, %v960, 0
  %v980 = vsel %vm68, %v954, 0
  %982 = vmatprep.subr.bf16.mxu0 0
  %983 = vmatpush1.bf16.msra.mxu0 0
  %984 = vmatprep.subr.bf16.mxu0 0
  %985 = vmatpush1.bf16.msra.mxu0 0
  %986 = vmatprep.subr.bf16.mxu0 0
  %987 = vmatpush1.bf16.msra.mxu0 0
  %988 = vmatprep.subr.bf16.mxu0 0
  %989 = vmatpush1.bf16.msra.mxu0 0
  %990 = vmatprep.subr.bf16.mxu0 0
  %991 = vmatpush1.bf16.msra.mxu0 0
  %992 = vmatprep.subr.bf16.mxu0 0
  %993 = vmatpush1.bf16.msra.mxu0 0
  %994 = vmatprep.subr.bf16.mxu0 0
  %995 = vmatpush1.bf16.msra.mxu0 0
  %996 = vmatprep.subr.bf16.mxu0 %v968
  %997 = vmatpush1.bf16.msra.mxu0 %v965
  %998 = vmatprep.subr.bf16.mxu0 0
  %999 = vmatpush2.bf16.msra.mxu0 0
  %1000 = vmatprep.subr.bf16.mxu0 0
  %1001 = vmatpush2.bf16.msra.mxu0 0
  %1002 = vmatprep.subr.bf16.mxu0 0
  %1003 = vmatpush2.bf16.msra.mxu0 0
  %1004 = vmatprep.subr.bf16.mxu0 0
  %1005 = vmatpush2.bf16.msra.mxu0 0
  %1006 = vmatprep.subr.bf16.mxu0 0
  %1007 = vmatpush2.bf16.msra.mxu0 0
  %1008 = vmatprep.subr.bf16.mxu0 0
  %1009 = vmatpush2.bf16.msra.mxu0 0
  %1010 = vmatprep.subr.bf16.mxu0 0
  %1011 = vmatpush2.bf16.msra.mxu0 0
  %1012 = vmatprep.subr.bf16.mxu0 0
  %1013 = vmatpush2.bf16.msra.mxu0 0
  %1014 = vmatprep.mubr.bf16.mxu0 0
  %1015 = vmatmul.mubr.bf16.gmra.mxu0 %v962
  %v1016 = vpop.f32.mrf.mxu0
  %v1017 = vadd.f32 0.0, %v1016
  %v1018 = vpop.f32.mrf.mxu0
  %v1019 = vadd.f32 0.0, %v1018
  %v1020 = vpop.f32.mrf.mxu0
  %v1021 = vadd.f32 0.0, %v1020
  %v1022 = vpop.f32.mrf.mxu0
  %v1023 = vadd.f32 0.0, %v1022
  %1024 = vdwg.mxu0
  %1025 = vmatprep.subr.bf16.mxu0 0
  %1026 = vmatpush1.bf16.msra.mxu0 0
  %1027 = vmatprep.subr.bf16.mxu0 0
  %1028 = vmatpush1.bf16.msra.mxu0 0
  %1029 = vmatprep.subr.bf16.mxu0 0
  %1030 = vmatpush1.bf16.msra.mxu0 0
  %1031 = vmatprep.subr.bf16.mxu0 0
  %1032 = vmatpush1.bf16.msra.mxu0 0
  %1033 = vmatprep.subr.bf16.mxu0 0
  %1034 = vmatpush1.bf16.msra.mxu0 0
  %1035 = vmatprep.subr.bf16.mxu0 0
  %1036 = vmatpush1.bf16.msra.mxu0 0
  %1037 = vmatprep.subr.bf16.mxu0 0
  %1038 = vmatpush1.bf16.msra.mxu0 0
  %1039 = vmatprep.subr.bf16.mxu0 %v974
  %1040 = vmatpush1.bf16.msra.mxu0 %v971
  %1041 = vmatprep.subr.bf16.mxu0 0
  %1042 = vmatpush2.bf16.msra.mxu0 0
  %1043 = vmatprep.subr.bf16.mxu0 0
  %1044 = vmatpush2.bf16.msra.mxu0 0
  %1045 = vmatprep.subr.bf16.mxu0 0
  %1046 = vmatpush2.bf16.msra.mxu0 0
  %1047 = vmatprep.subr.bf16.mxu0 0
  %1048 = vmatpush2.bf16.msra.mxu0 0
  %1049 = vmatprep.subr.bf16.mxu0 0
  %1050 = vmatpush2.bf16.msra.mxu0 0
  %1051 = vmatprep.subr.bf16.mxu0 0
  %1052 = vmatpush2.bf16.msra.mxu0 0
  %1053 = vmatprep.subr.bf16.mxu0 0
  %1054 = vmatpush2.bf16.msra.mxu0 0
  %1055 = vmatprep.subr.bf16.mxu0 0
  %1056 = vmatpush2.bf16.msra.mxu0 0
  %1057 = vmatprep.mubr.bf16.mxu0 0
  %1058 = vmatmul.mubr.bf16.gmra.mxu0 %v962
  %v1059 = vpop.f32.mrf.mxu0
  %v1060 = vadd.f32 0.0, %v1059
  %v1061 = vpop.f32.mrf.mxu0
  %v1062 = vadd.f32 0.0, %v1061
  %v1063 = vpop.f32.mrf.mxu0
  %v1064 = vadd.f32 0.0, %v1063
  %v1065 = vpop.f32.mrf.mxu0
  %v1066 = vadd.f32 0.0, %v1065
  %1067 = vdwg.mxu0
  %1068 = vmatprep.subr.bf16.mxu0 0
  %1069 = vmatpush1.bf16.msra.mxu0 0
  %1070 = vmatprep.subr.bf16.mxu0 0
  %1071 = vmatpush1.bf16.msra.mxu0 0
  %1072 = vmatprep.subr.bf16.mxu0 0
  %1073 = vmatpush1.bf16.msra.mxu0 0
  %1074 = vmatprep.subr.bf16.mxu0 0
  %1075 = vmatpush1.bf16.msra.mxu0 0
  %1076 = vmatprep.subr.bf16.mxu0 0
  %1077 = vmatpush1.bf16.msra.mxu0 0
  %1078 = vmatprep.subr.bf16.mxu0 0
  %1079 = vmatpush1.bf16.msra.mxu0 0
  %1080 = vmatprep.subr.bf16.mxu0 0
  %1081 = vmatpush1.bf16.msra.mxu0 0
  %1082 = vmatprep.subr.bf16.mxu0 %v980
  %1083 = vmatpush1.bf16.msra.mxu0 %v977
  %1084 = vmatprep.subr.bf16.mxu0 0
  %1085 = vmatpush2.bf16.msra.mxu0 0
  %1086 = vmatprep.subr.bf16.mxu0 0
  %1087 = vmatpush2.bf16.msra.mxu0 0
  %1088 = vmatprep.subr.bf16.mxu0 0
  %1089 = vmatpush2.bf16.msra.mxu0 0
  %1090 = vmatprep.subr.bf16.mxu0 0
  %1091 = vmatpush2.bf16.msra.mxu0 0
  %1092 = vmatprep.subr.bf16.mxu0 0
  %1093 = vmatpush2.bf16.msra.mxu0 0
  %1094 = vmatprep.subr.bf16.mxu0 0
  %1095 = vmatpush2.bf16.msra.mxu0 0
  %1096 = vmatprep.subr.bf16.mxu0 0
  %1097 = vmatpush2.bf16.msra.mxu0 0
  %1098 = vmatprep.subr.bf16.mxu0 0
  %1099 = vmatpush2.bf16.msra.mxu0 0
  %1100 = vmatprep.mubr.bf16.mxu0 0
  %1101 = vmatmul.mubr.bf16.gmra.mxu0 %v962
  %v1102 = vpop.f32.mrf.mxu0
  %v1103 = vadd.f32 0.0, %v1102
  %v1104 = vpop.f32.mrf.mxu0
  %v1105 = vadd.f32 0.0, %v1104
  %v1106 = vpop.f32.mrf.mxu0
  %v1107 = vadd.f32 0.0, %v1106
  %v1108 = vpop.f32.mrf.mxu0
  %v1109 = vadd.f32 0.0, %v1108
  %1110 = vdwg.mxu0
  %v1111 = vadd.f32 %v923, %v1017
  %v1112 = vadd.f32 %v924, %v1019
  %v1113 = vadd.f32 %v925, %v1060
  %v1114 = vadd.f32 %v926, %v1062
  %v1115 = vadd.f32 %v927, %v1103
  %v1116 = vadd.f32 %v928, %v1105
  %v1117 = vadd.f32 %v929, %v1021
  %v1118 = vadd.f32 %v930, %v1023
  %v1119 = vadd.f32 %v931, %v1064
  %v1120 = vadd.f32 %v932, %v1066
  %v1121 = vadd.f32 %v933, %v1107
  %v1122 = vadd.f32 %v934, %v1109
  %s1123 = scalar_lea.vmem %s1, 48
  %v1124 = vld [vmem:[%s1123] sm:$0xf]
  %v1125 = vld [vmem:[%s1123 + $0x4] sm:$0xf]
  %v1128 = vunpack.c.l.b16 %v1124
  %v1129 = vunpack.c.l.b16 %v1125
  %v1130 = vpack.c.b16 %v1129, %v1128
  %1131 = vrot.lane.b32.xlu0 %v40, 92
  %v1132 = vpop.permute.xlu0 %1131
  %1133 = vrot.lane.b32.xlu0 %v41, 92
  %v1134 = vpop.permute.xlu0 %1133
  %1135 = vrot.lane.b32.xlu0 %v42, 92
  %v1136 = vpop.permute.xlu0 %1135
  %1137 = vrot.lane.b32.xlu0 %v43, 92
  %v1138 = vpop.permute.xlu0 %1137
  %1139 = vrot.lane.b32.xlu0 %v44, 92
  %v1140 = vpop.permute.xlu0 %1139
  %1141 = vrot.lane.b32.xlu0 %v45, 92
  %v1142 = vpop.permute.xlu0 %1141
  %vm1143 = vcmask 752640
  %v1144 = vsel %vm1143, %v1132, %v1134
  %v1145 = vsel %vm1143, %v1134, %v1136
  %v1146 = vsel %vm1143, %v1136, %v1138
  %v1147 = vsel %vm1143, %v1138, %v1140
  %v1148 = vsel %vm1143, %v1140, %v1142
  %v1150 = vsel %vm64, %v1130, 0
  %v1153 = vsel %vm68, %v1144, 0
  %v1156 = vsel %vm68, %v1145, 0
  %v1159 = vsel %vm68, %v1146, 0
  %v1162 = vsel %vm68, %v1147, 0
  %v1165 = vsel %vm68, %v1148, 0
  %v1168 = vsel %vm68, %v1142, 0
  %1170 = vmatprep.subr.bf16.mxu0 0
  %1171 = vmatpush1.bf16.msra.mxu0 0
  %1172 = vmatprep.subr.bf16.mxu0 0
  %1173 = vmatpush1.bf16.msra.mxu0 0
  %1174 = vmatprep.subr.bf16.mxu0 0
  %1175 = vmatpush1.bf16.msra.mxu0 0
  %1176 = vmatprep.subr.bf16.mxu0 0
  %1177 = vmatpush1.bf16.msra.mxu0 0
  %1178 = vmatprep.subr.bf16.mxu0 0
  %1179 = vmatpush1.bf16.msra.mxu0 0
  %1180 = vmatprep.subr.bf16.mxu0 0
  %1181 = vmatpush1.bf16.msra.mxu0 0
  %1182 = vmatprep.subr.bf16.mxu0 0
  %1183 = vmatpush1.bf16.msra.mxu0 0
  %1184 = vmatprep.subr.bf16.mxu0 %v1156
  %1185 = vmatpush1.bf16.msra.mxu0 %v1153
  %1186 = vmatprep.subr.bf16.mxu0 0
  %1187 = vmatpush2.bf16.msra.mxu0 0
  %1188 = vmatprep.subr.bf16.mxu0 0
  %1189 = vmatpush2.bf16.msra.mxu0 0
  %1190 = vmatprep.subr.bf16.mxu0 0
  %1191 = vmatpush2.bf16.msra.mxu0 0
  %1192 = vmatprep.subr.bf16.mxu0 0
  %1193 = vmatpush2.bf16.msra.mxu0 0
  %1194 = vmatprep.subr.bf16.mxu0 0
  %1195 = vmatpush2.bf16.msra.mxu0 0
  %1196 = vmatprep.subr.bf16.mxu0 0
  %1197 = vmatpush2.bf16.msra.mxu0 0
  %1198 = vmatprep.subr.bf16.mxu0 0
  %1199 = vmatpush2.bf16.msra.mxu0 0
  %1200 = vmatprep.subr.bf16.mxu0 0
  %1201 = vmatpush2.bf16.msra.mxu0 0
  %1202 = vmatprep.mubr.bf16.mxu0 0
  %1203 = vmatmul.mubr.bf16.gmra.mxu0 %v1150
  %v1204 = vpop.f32.mrf.mxu0
  %v1205 = vadd.f32 0.0, %v1204
  %v1206 = vpop.f32.mrf.mxu0
  %v1207 = vadd.f32 0.0, %v1206
  %v1208 = vpop.f32.mrf.mxu0
  %v1209 = vadd.f32 0.0, %v1208
  %v1210 = vpop.f32.mrf.mxu0
  %v1211 = vadd.f32 0.0, %v1210
  %1212 = vdwg.mxu0
  %1213 = vmatprep.subr.bf16.mxu0 0
  %1214 = vmatpush1.bf16.msra.mxu0 0
  %1215 = vmatprep.subr.bf16.mxu0 0
  %1216 = vmatpush1.bf16.msra.mxu0 0
  %1217 = vmatprep.subr.bf16.mxu0 0
  %1218 = vmatpush1.bf16.msra.mxu0 0
  %1219 = vmatprep.subr.bf16.mxu0 0
  %1220 = vmatpush1.bf16.msra.mxu0 0
  %1221 = vmatprep.subr.bf16.mxu0 0
  %1222 = vmatpush1.bf16.msra.mxu0 0
  %1223 = vmatprep.subr.bf16.mxu0 0
  %1224 = vmatpush1.bf16.msra.mxu0 0
  %1225 = vmatprep.subr.bf16.mxu0 0
  %1226 = vmatpush1.bf16.msra.mxu0 0
  %1227 = vmatprep.subr.bf16.mxu0 %v1162
  %1228 = vmatpush1.bf16.msra.mxu0 %v1159
  %1229 = vmatprep.subr.bf16.mxu0 0
  %1230 = vmatpush2.bf16.msra.mxu0 0
  %1231 = vmatprep.subr.bf16.mxu0 0
  %1232 = vmatpush2.bf16.msra.mxu0 0
  %1233 = vmatprep.subr.bf16.mxu0 0
  %1234 = vmatpush2.bf16.msra.mxu0 0
  %1235 = vmatprep.subr.bf16.mxu0 0
  %1236 = vmatpush2.bf16.msra.mxu0 0
  %1237 = vmatprep.subr.bf16.mxu0 0
  %1238 = vmatpush2.bf16.msra.mxu0 0
  %1239 = vmatprep.subr.bf16.mxu0 0
  %1240 = vmatpush2.bf16.msra.mxu0 0
  %1241 = vmatprep.subr.bf16.mxu0 0
  %1242 = vmatpush2.bf16.msra.mxu0 0
  %1243 = vmatprep.subr.bf16.mxu0 0
  %1244 = vmatpush2.bf16.msra.mxu0 0
  %1245 = vmatprep.mubr.bf16.mxu0 0
  %1246 = vmatmul.mubr.bf16.gmra.mxu0 %v1150
  %v1247 = vpop.f32.mrf.mxu0
  %v1248 = vadd.f32 0.0, %v1247
  %v1249 = vpop.f32.mrf.mxu0
  %v1250 = vadd.f32 0.0, %v1249
  %v1251 = vpop.f32.mrf.mxu0
  %v1252 = vadd.f32 0.0, %v1251
  %v1253 = vpop.f32.mrf.mxu0
  %v1254 = vadd.f32 0.0, %v1253
  %1255 = vdwg.mxu0
  %1256 = vmatprep.subr.bf16.mxu0 0
  %1257 = vmatpush1.bf16.msra.mxu0 0
  %1258 = vmatprep.subr.bf16.mxu0 0
  %1259 = vmatpush1.bf16.msra.mxu0 0
  %1260 = vmatprep.subr.bf16.mxu0 0
  %1261 = vmatpush1.bf16.msra.mxu0 0
  %1262 = vmatprep.subr.bf16.mxu0 0
  %1263 = vmatpush1.bf16.msra.mxu0 0
  %1264 = vmatprep.subr.bf16.mxu0 0
  %1265 = vmatpush1.bf16.msra.mxu0 0
  %1266 = vmatprep.subr.bf16.mxu0 0
  %1267 = vmatpush1.bf16.msra.mxu0 0
  %1268 = vmatprep.subr.bf16.mxu0 0
  %1269 = vmatpush1.bf16.msra.mxu0 0
  %1270 = vmatprep.subr.bf16.mxu0 %v1168
  %1271 = vmatpush1.bf16.msra.mxu0 %v1165
  %1272 = vmatprep.subr.bf16.mxu0 0
  %1273 = vmatpush2.bf16.msra.mxu0 0
  %1274 = vmatprep.subr.bf16.mxu0 0
  %1275 = vmatpush2.bf16.msra.mxu0 0
  %1276 = vmatprep.subr.bf16.mxu0 0
  %1277 = vmatpush2.bf16.msra.mxu0 0
  %1278 = vmatprep.subr.bf16.mxu0 0
  %1279 = vmatpush2.bf16.msra.mxu0 0
  %1280 = vmatprep.subr.bf16.mxu0 0
  %1281 = vmatpush2.bf16.msra.mxu0 0
  %1282 = vmatprep.subr.bf16.mxu0 0
  %1283 = vmatpush2.bf16.msra.mxu0 0
  %1284 = vmatprep.subr.bf16.mxu0 0
  %1285 = vmatpush2.bf16.msra.mxu0 0
  %1286 = vmatprep.subr.bf16.mxu0 0
  %1287 = vmatpush2.bf16.msra.mxu0 0
  %1288 = vmatprep.mubr.bf16.mxu0 0
  %1289 = vmatmul.mubr.bf16.gmra.mxu0 %v1150
  %v1290 = vpop.f32.mrf.mxu0
  %v1291 = vadd.f32 0.0, %v1290
  %v1292 = vpop.f32.mrf.mxu0
  %v1293 = vadd.f32 0.0, %v1292
  %v1294 = vpop.f32.mrf.mxu0
  %v1295 = vadd.f32 0.0, %v1294
  %v1296 = vpop.f32.mrf.mxu0
  %v1297 = vadd.f32 0.0, %v1296
  %1298 = vdwg.mxu0
  %v1299 = vadd.f32 %v1111, %v1205
  %v1300 = vadd.f32 %v1112, %v1207
  %v1301 = vadd.f32 %v1113, %v1248
  %v1302 = vadd.f32 %v1114, %v1250
  %v1303 = vadd.f32 %v1115, %v1291
  %v1304 = vadd.f32 %v1116, %v1293
  %v1305 = vadd.f32 %v1117, %v1209
  %v1306 = vadd.f32 %v1118, %v1211
  %v1307 = vadd.f32 %v1119, %v1252
  %v1308 = vadd.f32 %v1120, %v1254
  %v1309 = vadd.f32 %v1121, %v1295
  %v1310 = vadd.f32 %v1122, %v1297
  %s1311 = scalar_lea.vmem %s1, 56
  %v1312 = vld [vmem:[%s1311] sm:$0xf]
  %v1313 = vld [vmem:[%s1311 + $0x4] sm:$0xf]
  %v1316 = vunpack.c.l.b16 %v1312
  %v1317 = vunpack.c.l.b16 %v1313
  %v1318 = vpack.c.b16 %v1317, %v1316
  %1319 = vrot.lane.b32.xlu0 %v40, 91
  %v1320 = vpop.permute.xlu0 %1319
  %1321 = vrot.lane.b32.xlu0 %v41, 91
  %v1322 = vpop.permute.xlu0 %1321
  %1323 = vrot.lane.b32.xlu0 %v42, 91
  %v1324 = vpop.permute.xlu0 %1323
  %1325 = vrot.lane.b32.xlu0 %v43, 91
  %v1326 = vpop.permute.xlu0 %1325
  %1327 = vrot.lane.b32.xlu0 %v44, 91
  %v1328 = vpop.permute.xlu0 %1327
  %1329 = vrot.lane.b32.xlu0 %v45, 91
  %v1330 = vpop.permute.xlu0 %1329
  %vm1331 = vcmask 744448
  %v1332 = vsel %vm1331, %v1320, %v1322
  %v1333 = vsel %vm1331, %v1322, %v1324
  %v1334 = vsel %vm1331, %v1324, %v1326
  %v1335 = vsel %vm1331, %v1326, %v1328
  %v1336 = vsel %vm1331, %v1328, %v1330
  %v1338 = vsel %vm64, %v1318, 0
  %v1341 = vsel %vm68, %v1332, 0
  %v1344 = vsel %vm68, %v1333, 0
  %v1347 = vsel %vm68, %v1334, 0
  %v1350 = vsel %vm68, %v1335, 0
  %v1353 = vsel %vm68, %v1336, 0
  %v1356 = vsel %vm68, %v1330, 0
  %1358 = vmatprep.subr.bf16.mxu0 0
  %1359 = vmatpush1.bf16.msra.mxu0 0
  %1360 = vmatprep.subr.bf16.mxu0 0
  %1361 = vmatpush1.bf16.msra.mxu0 0
  %1362 = vmatprep.subr.bf16.mxu0 0
  %1363 = vmatpush1.bf16.msra.mxu0 0
  %1364 = vmatprep.subr.bf16.mxu0 0
  %1365 = vmatpush1.bf16.msra.mxu0 0
  %1366 = vmatprep.subr.bf16.mxu0 0
  %1367 = vmatpush1.bf16.msra.mxu0 0
  %1368 = vmatprep.subr.bf16.mxu0 0
  %1369 = vmatpush1.bf16.msra.mxu0 0
  %1370 = vmatprep.subr.bf16.mxu0 0
  %1371 = vmatpush1.bf16.msra.mxu0 0
  %1372 = vmatprep.subr.bf16.mxu0 %v1344
  %1373 = vmatpush1.bf16.msra.mxu0 %v1341
  %1374 = vmatprep.subr.bf16.mxu0 0
  %1375 = vmatpush2.bf16.msra.mxu0 0
  %1376 = vmatprep.subr.bf16.mxu0 0
  %1377 = vmatpush2.bf16.msra.mxu0 0
  %1378 = vmatprep.subr.bf16.mxu0 0
  %1379 = vmatpush2.bf16.msra.mxu0 0
  %1380 = vmatprep.subr.bf16.mxu0 0
  %1381 = vmatpush2.bf16.msra.mxu0 0
  %1382 = vmatprep.subr.bf16.mxu0 0
  %1383 = vmatpush2.bf16.msra.mxu0 0
  %1384 = vmatprep.subr.bf16.mxu0 0
  %1385 = vmatpush2.bf16.msra.mxu0 0
  %1386 = vmatprep.subr.bf16.mxu0 0
  %1387 = vmatpush2.bf16.msra.mxu0 0
  %1388 = vmatprep.subr.bf16.mxu0 0
  %1389 = vmatpush2.bf16.msra.mxu0 0
  %1390 = vmatprep.mubr.bf16.mxu0 0
  %1391 = vmatmul.mubr.bf16.gmra.mxu0 %v1338
  %v1392 = vpop.f32.mrf.mxu0
  %v1393 = vadd.f32 0.0, %v1392
  %v1394 = vpop.f32.mrf.mxu0
  %v1395 = vadd.f32 0.0, %v1394
  %v1396 = vpop.f32.mrf.mxu0
  %v1397 = vadd.f32 0.0, %v1396
  %v1398 = vpop.f32.mrf.mxu0
  %v1399 = vadd.f32 0.0, %v1398
  %1400 = vdwg.mxu0
  %1401 = vmatprep.subr.bf16.mxu0 0
  %1402 = vmatpush1.bf16.msra.mxu0 0
  %1403 = vmatprep.subr.bf16.mxu0 0
  %1404 = vmatpush1.bf16.msra.mxu0 0
  %1405 = vmatprep.subr.bf16.mxu0 0
  %1406 = vmatpush1.bf16.msra.mxu0 0
  %1407 = vmatprep.subr.bf16.mxu0 0
  %1408 = vmatpush1.bf16.msra.mxu0 0
  %1409 = vmatprep.subr.bf16.mxu0 0
  %1410 = vmatpush1.bf16.msra.mxu0 0
  %1411 = vmatprep.subr.bf16.mxu0 0
  %1412 = vmatpush1.bf16.msra.mxu0 0
  %1413 = vmatprep.subr.bf16.mxu0 0
  %1414 = vmatpush1.bf16.msra.mxu0 0
  %1415 = vmatprep.subr.bf16.mxu0 %v1350
  %1416 = vmatpush1.bf16.msra.mxu0 %v1347
  %1417 = vmatprep.subr.bf16.mxu0 0
  %1418 = vmatpush2.bf16.msra.mxu0 0
  %1419 = vmatprep.subr.bf16.mxu0 0
  %1420 = vmatpush2.bf16.msra.mxu0 0
  %1421 = vmatprep.subr.bf16.mxu0 0
  %1422 = vmatpush2.bf16.msra.mxu0 0
  %1423 = vmatprep.subr.bf16.mxu0 0
  %1424 = vmatpush2.bf16.msra.mxu0 0
  %1425 = vmatprep.subr.bf16.mxu0 0
  %1426 = vmatpush2.bf16.msra.mxu0 0
  %1427 = vmatprep.subr.bf16.mxu0 0
  %1428 = vmatpush2.bf16.msra.mxu0 0
  %1429 = vmatprep.subr.bf16.mxu0 0
  %1430 = vmatpush2.bf16.msra.mxu0 0
  %1431 = vmatprep.subr.bf16.mxu0 0
  %1432 = vmatpush2.bf16.msra.mxu0 0
  %1433 = vmatprep.mubr.bf16.mxu0 0
  %1434 = vmatmul.mubr.bf16.gmra.mxu0 %v1338
  %v1435 = vpop.f32.mrf.mxu0
  %v1436 = vadd.f32 0.0, %v1435
  %v1437 = vpop.f32.mrf.mxu0
  %v1438 = vadd.f32 0.0, %v1437
  %v1439 = vpop.f32.mrf.mxu0
  %v1440 = vadd.f32 0.0, %v1439
  %v1441 = vpop.f32.mrf.mxu0
  %v1442 = vadd.f32 0.0, %v1441
  %1443 = vdwg.mxu0
  %1444 = vmatprep.subr.bf16.mxu0 0
  %1445 = vmatpush1.bf16.msra.mxu0 0
  %1446 = vmatprep.subr.bf16.mxu0 0
  %1447 = vmatpush1.bf16.msra.mxu0 0
  %1448 = vmatprep.subr.bf16.mxu0 0
  %1449 = vmatpush1.bf16.msra.mxu0 0
  %1450 = vmatprep.subr.bf16.mxu0 0
  %1451 = vmatpush1.bf16.msra.mxu0 0
  %1452 = vmatprep.subr.bf16.mxu0 0
  %1453 = vmatpush1.bf16.msra.mxu0 0
  %1454 = vmatprep.subr.bf16.mxu0 0
  %1455 = vmatpush1.bf16.msra.mxu0 0
  %1456 = vmatprep.subr.bf16.mxu0 0
  %1457 = vmatpush1.bf16.msra.mxu0 0
  %1458 = vmatprep.subr.bf16.mxu0 %v1356
  %1459 = vmatpush1.bf16.msra.mxu0 %v1353
  %1460 = vmatprep.subr.bf16.mxu0 0
  %1461 = vmatpush2.bf16.msra.mxu0 0
  %1462 = vmatprep.subr.bf16.mxu0 0
  %1463 = vmatpush2.bf16.msra.mxu0 0
  %1464 = vmatprep.subr.bf16.mxu0 0
  %1465 = vmatpush2.bf16.msra.mxu0 0
  %1466 = vmatprep.subr.bf16.mxu0 0
  %1467 = vmatpush2.bf16.msra.mxu0 0
  %1468 = vmatprep.subr.bf16.mxu0 0
  %1469 = vmatpush2.bf16.msra.mxu0 0
  %1470 = vmatprep.subr.bf16.mxu0 0
  %1471 = vmatpush2.bf16.msra.mxu0 0
  %1472 = vmatprep.subr.bf16.mxu0 0
  %1473 = vmatpush2.bf16.msra.mxu0 0
  %1474 = vmatprep.subr.bf16.mxu0 0
  %1475 = vmatpush2.bf16.msra.mxu0 0
  %1476 = vmatprep.mubr.bf16.mxu0 0
  %1477 = vmatmul.mubr.bf16.gmra.mxu0 %v1338
  %v1478 = vpop.f32.mrf.mxu0
  %v1479 = vadd.f32 0.0, %v1478
  %v1480 = vpop.f32.mrf.mxu0
  %v1481 = vadd.f32 0.0, %v1480
  %v1482 = vpop.f32.mrf.mxu0
  %v1483 = vadd.f32 0.0, %v1482
  %v1484 = vpop.f32.mrf.mxu0
  %v1485 = vadd.f32 0.0, %v1484
  %1486 = vdwg.mxu0
  %v1487 = vadd.f32 %v1299, %v1393
  %v1488 = vadd.f32 %v1300, %v1395
  %v1489 = vadd.f32 %v1301, %v1436
  %v1490 = vadd.f32 %v1302, %v1438
  %v1491 = vadd.f32 %v1303, %v1479
  %v1492 = vadd.f32 %v1304, %v1481
  %v1493 = vadd.f32 %v1305, %v1397
  %v1494 = vadd.f32 %v1306, %v1399
  %v1495 = vadd.f32 %v1307, %v1440
  %v1496 = vadd.f32 %v1308, %v1442
  %v1497 = vadd.f32 %v1309, %v1483
  %v1498 = vadd.f32 %v1310, %v1485
  %s1499 = scalar_lea.vmem %s1, 64
  %v1500 = vld [vmem:[%s1499] sm:$0xf]
  %v1501 = vld [vmem:[%s1499 + $0x4] sm:$0xf]
  %v1504 = vunpack.c.l.b16 %v1500
  %v1505 = vunpack.c.l.b16 %v1501
  %v1506 = vpack.c.b16 %v1505, %v1504
  %1507 = vrot.lane.b32.xlu0 %v40, 90
  %v1508 = vpop.permute.xlu0 %1507
  %1509 = vrot.lane.b32.xlu0 %v41, 90
  %v1510 = vpop.permute.xlu0 %1509
  %1511 = vrot.lane.b32.xlu0 %v42, 90
  %v1512 = vpop.permute.xlu0 %1511
  %1513 = vrot.lane.b32.xlu0 %v43, 90
  %v1514 = vpop.permute.xlu0 %1513
  %1515 = vrot.lane.b32.xlu0 %v44, 90
  %v1516 = vpop.permute.xlu0 %1515
  %1517 = vrot.lane.b32.xlu0 %v45, 90
  %v1518 = vpop.permute.xlu0 %1517
  %vm1519 = vcmask 736256
  %v1520 = vsel %vm1519, %v1508, %v1510
  %v1521 = vsel %vm1519, %v1510, %v1512
  %v1522 = vsel %vm1519, %v1512, %v1514
  %v1523 = vsel %vm1519, %v1514, %v1516
  %v1524 = vsel %vm1519, %v1516, %v1518
  %v1526 = vsel %vm64, %v1506, 0
  %v1529 = vsel %vm68, %v1520, 0
  %v1532 = vsel %vm68, %v1521, 0
  %v1535 = vsel %vm68, %v1522, 0
  %v1538 = vsel %vm68, %v1523, 0
  %v1541 = vsel %vm68, %v1524, 0
  %v1544 = vsel %vm68, %v1518, 0
  %1546 = vmatprep.subr.bf16.mxu0 0
  %1547 = vmatpush1.bf16.msra.mxu0 0
  %1548 = vmatprep.subr.bf16.mxu0 0
  %1549 = vmatpush1.bf16.msra.mxu0 0
  %1550 = vmatprep.subr.bf16.mxu0 0
  %1551 = vmatpush1.bf16.msra.mxu0 0
  %1552 = vmatprep.subr.bf16.mxu0 0
  %1553 = vmatpush1.bf16.msra.mxu0 0
  %1554 = vmatprep.subr.bf16.mxu0 0
  %1555 = vmatpush1.bf16.msra.mxu0 0
  %1556 = vmatprep.subr.bf16.mxu0 0
  %1557 = vmatpush1.bf16.msra.mxu0 0
  %1558 = vmatprep.subr.bf16.mxu0 0
  %1559 = vmatpush1.bf16.msra.mxu0 0
  %1560 = vmatprep.subr.bf16.mxu0 %v1532
  %1561 = vmatpush1.bf16.msra.mxu0 %v1529
  %1562 = vmatprep.subr.bf16.mxu0 0
  %1563 = vmatpush2.bf16.msra.mxu0 0
  %1564 = vmatprep.subr.bf16.mxu0 0
  %1565 = vmatpush2.bf16.msra.mxu0 0
  %1566 = vmatprep.subr.bf16.mxu0 0
  %1567 = vmatpush2.bf16.msra.mxu0 0
  %1568 = vmatprep.subr.bf16.mxu0 0
  %1569 = vmatpush2.bf16.msra.mxu0 0
  %1570 = vmatprep.subr.bf16.mxu0 0
  %1571 = vmatpush2.bf16.msra.mxu0 0
  %1572 = vmatprep.subr.bf16.mxu0 0
  %1573 = vmatpush2.bf16.msra.mxu0 0
  %1574 = vmatprep.subr.bf16.mxu0 0
  %1575 = vmatpush2.bf16.msra.mxu0 0
  %1576 = vmatprep.subr.bf16.mxu0 0
  %1577 = vmatpush2.bf16.msra.mxu0 0
  %1578 = vmatprep.mubr.bf16.mxu0 0
  %1579 = vmatmul.mubr.bf16.gmra.mxu0 %v1526
  %v1580 = vpop.f32.mrf.mxu0
  %v1581 = vadd.f32 0.0, %v1580
  %v1582 = vpop.f32.mrf.mxu0
  %v1583 = vadd.f32 0.0, %v1582
  %v1584 = vpop.f32.mrf.mxu0
  %v1585 = vadd.f32 0.0, %v1584
  %v1586 = vpop.f32.mrf.mxu0
  %v1587 = vadd.f32 0.0, %v1586
  %1588 = vdwg.mxu0
  %1589 = vmatprep.subr.bf16.mxu0 0
  %1590 = vmatpush1.bf16.msra.mxu0 0
  %1591 = vmatprep.subr.bf16.mxu0 0
  %1592 = vmatpush1.bf16.msra.mxu0 0
  %1593 = vmatprep.subr.bf16.mxu0 0
  %1594 = vmatpush1.bf16.msra.mxu0 0
  %1595 = vmatprep.subr.bf16.mxu0 0
  %1596 = vmatpush1.bf16.msra.mxu0 0
  %1597 = vmatprep.subr.bf16.mxu0 0
  %1598 = vmatpush1.bf16.msra.mxu0 0
  %1599 = vmatprep.subr.bf16.mxu0 0
  %1600 = vmatpush1.bf16.msra.mxu0 0
  %1601 = vmatprep.subr.bf16.mxu0 0
  %1602 = vmatpush1.bf16.msra.mxu0 0
  %1603 = vmatprep.subr.bf16.mxu0 %v1538
  %1604 = vmatpush1.bf16.msra.mxu0 %v1535
  %1605 = vmatprep.subr.bf16.mxu0 0
  %1606 = vmatpush2.bf16.msra.mxu0 0
  %1607 = vmatprep.subr.bf16.mxu0 0
  %1608 = vmatpush2.bf16.msra.mxu0 0
  %1609 = vmatprep.subr.bf16.mxu0 0
  %1610 = vmatpush2.bf16.msra.mxu0 0
  %1611 = vmatprep.subr.bf16.mxu0 0
  %1612 = vmatpush2.bf16.msra.mxu0 0
  %1613 = vmatprep.subr.bf16.mxu0 0
  %1614 = vmatpush2.bf16.msra.mxu0 0
  %1615 = vmatprep.subr.bf16.mxu0 0
  %1616 = vmatpush2.bf16.msra.mxu0 0
  %1617 = vmatprep.subr.bf16.mxu0 0
  %1618 = vmatpush2.bf16.msra.mxu0 0
  %1619 = vmatprep.subr.bf16.mxu0 0
  %1620 = vmatpush2.bf16.msra.mxu0 0
  %1621 = vmatprep.mubr.bf16.mxu0 0
  %1622 = vmatmul.mubr.bf16.gmra.mxu0 %v1526
  %v1623 = vpop.f32.mrf.mxu0
  %v1624 = vadd.f32 0.0, %v1623
  %v1625 = vpop.f32.mrf.mxu0
  %v1626 = vadd.f32 0.0, %v1625
  %v1627 = vpop.f32.mrf.mxu0
  %v1628 = vadd.f32 0.0, %v1627
  %v1629 = vpop.f32.mrf.mxu0
  %v1630 = vadd.f32 0.0, %v1629
  %1631 = vdwg.mxu0
  %1632 = vmatprep.subr.bf16.mxu0 0
  %1633 = vmatpush1.bf16.msra.mxu0 0
  %1634 = vmatprep.subr.bf16.mxu0 0
  %1635 = vmatpush1.bf16.msra.mxu0 0
  %1636 = vmatprep.subr.bf16.mxu0 0
  %1637 = vmatpush1.bf16.msra.mxu0 0
  %1638 = vmatprep.subr.bf16.mxu0 0
  %1639 = vmatpush1.bf16.msra.mxu0 0
  %1640 = vmatprep.subr.bf16.mxu0 0
  %1641 = vmatpush1.bf16.msra.mxu0 0
  %1642 = vmatprep.subr.bf16.mxu0 0
  %1643 = vmatpush1.bf16.msra.mxu0 0
  %1644 = vmatprep.subr.bf16.mxu0 0
  %1645 = vmatpush1.bf16.msra.mxu0 0
  %1646 = vmatprep.subr.bf16.mxu0 %v1544
  %1647 = vmatpush1.bf16.msra.mxu0 %v1541
  %1648 = vmatprep.subr.bf16.mxu0 0
  %1649 = vmatpush2.bf16.msra.mxu0 0
  %1650 = vmatprep.subr.bf16.mxu0 0
  %1651 = vmatpush2.bf16.msra.mxu0 0
  %1652 = vmatprep.subr.bf16.mxu0 0
  %1653 = vmatpush2.bf16.msra.mxu0 0
  %1654 = vmatprep.subr.bf16.mxu0 0
  %1655 = vmatpush2.bf16.msra.mxu0 0
  %1656 = vmatprep.subr.bf16.mxu0 0
  %1657 = vmatpush2.bf16.msra.mxu0 0
  %1658 = vmatprep.subr.bf16.mxu0 0
  %1659 = vmatpush2.bf16.msra.mxu0 0
  %1660 = vmatprep.subr.bf16.mxu0 0
  %1661 = vmatpush2.bf16.msra.mxu0 0
  %1662 = vmatprep.subr.bf16.mxu0 0
  %1663 = vmatpush2.bf16.msra.mxu0 0
  %1664 = vmatprep.mubr.bf16.mxu0 0
  %1665 = vmatmul.mubr.bf16.gmra.mxu0 %v1526
  %v1666 = vpop.f32.mrf.mxu0
  %v1667 = vadd.f32 0.0, %v1666
  %v1668 = vpop.f32.mrf.mxu0
  %v1669 = vadd.f32 0.0, %v1668
  %v1670 = vpop.f32.mrf.mxu0
  %v1671 = vadd.f32 0.0, %v1670
  %v1672 = vpop.f32.mrf.mxu0
  %v1673 = vadd.f32 0.0, %v1672
  %1674 = vdwg.mxu0
  %v1675 = vadd.f32 %v1487, %v1581
  %v1676 = vadd.f32 %v1488, %v1583
  %v1677 = vadd.f32 %v1489, %v1624
  %v1678 = vadd.f32 %v1490, %v1626
  %v1679 = vadd.f32 %v1491, %v1667
  %v1680 = vadd.f32 %v1492, %v1669
  %v1681 = vadd.f32 %v1493, %v1585
  %v1682 = vadd.f32 %v1494, %v1587
  %v1683 = vadd.f32 %v1495, %v1628
  %v1684 = vadd.f32 %v1496, %v1630
  %v1685 = vadd.f32 %v1497, %v1671
  %v1686 = vadd.f32 %v1498, %v1673
  %v1687 = vmax.f32 %v1675, 0.0
  %v1688 = vmax.f32 %v1676, 0.0
  %v1689 = vmax.f32 %v1677, 0.0
  %v1690 = vmax.f32 %v1678, 0.0
  %v1691 = vmax.f32 %v1679, 0.0
  %v1692 = vmax.f32 %v1680, 0.0
  %v1693 = vmax.f32 %v1681, 0.0
  %v1694 = vmax.f32 %v1682, 0.0
  %v1695 = vmax.f32 %v1683, 0.0
  %v1696 = vmax.f32 %v1684, 0.0
  %v1697 = vmax.f32 %v1685, 0.0
  %v1698 = vmax.f32 %v1686, 0.0
  %v1699 = vld [vmem:[%s2] sm:$0xff]
  %v1700 = vld [vmem:[%s2 + $0x8] sm:$0xff]
  %v1701 = vld [vmem:[%s2 + $0x10] sm:$0xff]
  %v1702 = vld [vmem:[%s2 + $0x18] sm:$0xff]
  %v1703 = vld [vmem:[%s2 + $0x20] sm:$0xff]
  %v1704 = vld [vmem:[%s2 + $0x28] sm:$0xff]
  %v1705 = vld [vmem:[%s2 + $0x30] sm:$0xff]
  %v1706 = vld [vmem:[%s2 + $0x38] sm:$0xff]
  %v1707 = vld [vmem:[%s2 + $0x40] sm:$0xff]
  %v1708 = vld [vmem:[%s2 + $0x48] sm:$0xff]
  %v1709 = vld [vmem:[%s2 + $0x50] sm:$0xff]
  %v1710 = vld [vmem:[%s2 + $0x58] sm:$0xff]
  %v1711 = vld [vmem:[%s2 + $0x60] sm:$0xff]
  %v1712 = vld [vmem:[%s2 + $0x68] sm:$0xff]
  %v1713 = vld [vmem:[%s2 + $0x70] sm:$0xff]
  %v1714 = vld [vmem:[%s2 + $0x78] sm:$0xff]
  %v1715 = vld [vmem:[%s2 + $0x80] sm:$0xff]
  %v1716 = vld [vmem:[%s2 + $0x88] sm:$0xff]
  %v1717 = vld [vmem:[%s2 + $0x90] sm:$0xff]
  %v1718 = vld [vmem:[%s2 + $0x98] sm:$0xff]
  %v1719 = vld [vmem:[%s2 + $0xa0] sm:$0xff]
  %v1720 = vld [vmem:[%s2 + $0xa8] sm:$0xff]
  %v1721 = vld [vmem:[%s2 + $0xb0] sm:$0xff]
  %v1722 = vld [vmem:[%s2 + $0xb8] sm:$0xff]
  %v1723 = vld [vmem:[%s2 + $0xc0] sm:$0xff]
  %v1724 = vld [vmem:[%s2 + $0xc8] sm:$0xff]
  %v1725 = vld [vmem:[%s2 + $0xd0] sm:$0xff]
  %v1726 = vld [vmem:[%s2 + $0xd8] sm:$0xff]
  %v1727 = vld [vmem:[%s2 + $0xe0] sm:$0xff]
  %v1728 = vld [vmem:[%s2 + $0xe8] sm:$0xff]
  %v1729 = vld [vmem:[%s2 + $0xf0] sm:$0xff]
  %v1730 = vld [vmem:[%s2 + $0xf8] sm:$0xff]
  %v1731 = vld [vmem:[%s2 + $0x100] sm:$0xff]
  %v1732 = vld [vmem:[%s2 + $0x108] sm:$0xff]
  %v1733 = vld [vmem:[%s2 + $0x110] sm:$0xff]
  %v1734 = vld [vmem:[%s2 + $0x118] sm:$0xff]
  %v1735 = vld [vmem:[%s2 + $0x120] sm:$0xff]
  %v1736 = vld [vmem:[%s2 + $0x128] sm:$0xff]
  %v1737 = vld [vmem:[%s2 + $0x130] sm:$0xff]
  %v1738 = vld [vmem:[%s2 + $0x138] sm:$0xff]
  %v1739 = vld [vmem:[%s2 + $0x140] sm:$0xff]
  %v1740 = vld [vmem:[%s2 + $0x148] sm:$0xff]
  %v1741 = vld [vmem:[%s2 + $0x150] sm:$0xff]
  %v1742 = vld [vmem:[%s2 + $0x158] sm:$0xff]
  %v1743 = vld [vmem:[%s2 + $0x160] sm:$0xff]
  %v1744 = vld [vmem:[%s2 + $0x168] sm:$0xff]
  %v1745 = vld [vmem:[%s2 + $0x170] sm:$0xff]
  %v1746 = vld [vmem:[%s2 + $0x178] sm:$0xff]
  %v1747 = vld [vmem:[%s2 + $0x180] sm:$0xff]
  %v1748 = vld [vmem:[%s2 + $0x188] sm:$0xff]
  %v1749 = vld [vmem:[%s2 + $0x190] sm:$0xff]
  %v1750 = vld [vmem:[%s2 + $0x198] sm:$0xff]
  %v1751 = vld [vmem:[%s2 + $0x1a0] sm:$0xff]
  %v1752 = vld [vmem:[%s2 + $0x1a8] sm:$0xff]
  %v1753 = vld [vmem:[%s2 + $0x1b0] sm:$0xff]
  %v1754 = vld [vmem:[%s2 + $0x1b8] sm:$0xff]
  %v1755 = vld [vmem:[%s2 + $0x1c0] sm:$0xff]
  %v1756 = vld [vmem:[%s2 + $0x1c8] sm:$0xff]
  %v1757 = vld [vmem:[%s2 + $0x1d0] sm:$0xff]
  %v1758 = vld [vmem:[%s2 + $0x1d8] sm:$0xff]
  %v1759 = vld [vmem:[%s2 + $0x1e0] sm:$0xff]
  %v1760 = vld [vmem:[%s2 + $0x1e8] sm:$0xff]
  %v1761 = vld [vmem:[%s2 + $0x1f0] sm:$0xff]
  %v1762 = vld [vmem:[%s2 + $0x1f8] sm:$0xff]
  %v1763 = vld [vmem:[%s2 + $0x200] sm:$0xff]
  %v1764 = vld [vmem:[%s2 + $0x208] sm:$0xff]
  %v1765 = vld [vmem:[%s2 + $0x210] sm:$0xff]
  %v1766 = vld [vmem:[%s2 + $0x218] sm:$0xff]
  %v1767 = vld [vmem:[%s2 + $0x220] sm:$0xff]
  %v1768 = vld [vmem:[%s2 + $0x228] sm:$0xff]
  %v1769 = vld [vmem:[%s2 + $0x230] sm:$0xff]
  %v1770 = vld [vmem:[%s2 + $0x238] sm:$0xff]
  %v1771 = vld [vmem:[%s2 + $0x240] sm:$0xff]
  %v1772 = vld [vmem:[%s2 + $0x248] sm:$0xff]
  %v1773 = vld [vmem:[%s2 + $0x250] sm:$0xff]
  %v1774 = vld [vmem:[%s2 + $0x258] sm:$0xff]
  %v1775 = vld [vmem:[%s2 + $0x260] sm:$0xff]
  %v1776 = vld [vmem:[%s2 + $0x268] sm:$0xff]
  %v1777 = vld [vmem:[%s2 + $0x270] sm:$0xff]
  %v1778 = vld [vmem:[%s2 + $0x278] sm:$0xff]
  %v1779 = vld [vmem:[%s2 + $0x280] sm:$0xff]
  %v1781 = vsel %vm64, %v1692, 0
  %v1784 = vsel %vm64, %v1698, 0
  %1786 = vmatprep.subr.mxu0 0.0
  %1787 = vmatpush1.msra.mxu0 %v1714
  %1788 = vmatprep.subr.mxu0 0.0
  %1789 = vmatpush1.msra.mxu0 %v1713
  %1790 = vmatprep.subr.mxu0 0.0
  %1791 = vmatpush1.msra.mxu0 %v1712
  %1792 = vmatprep.subr.mxu0 0.0
  %1793 = vmatpush1.msra.mxu0 %v1711
  %1794 = vmatprep.subr.mxu0 0.0
  %1795 = vmatpush1.msra.mxu0 %v1710
  %1796 = vmatprep.subr.mxu0 0.0
  %1797 = vmatpush1.msra.mxu0 %v1709
  %1798 = vmatprep.subr.mxu0 0.0
  %1799 = vmatpush1.msra.mxu0 %v1708
  %1800 = vmatprep.subr.mxu0 0.0
  %1801 = vmatpush1.msra.mxu0 %v1707
  %1802 = vmatprep.subr.mxu0 0.0
  %1803 = vmatpush1.msra.mxu0 %v1706
  %1804 = vmatprep.subr.mxu0 0.0
  %1805 = vmatpush1.msra.mxu0 %v1705
  %1806 = vmatprep.subr.mxu0 0.0
  %1807 = vmatpush1.msra.mxu0 %v1704
  %1808 = vmatprep.subr.mxu0 0.0
  %1809 = vmatpush1.msra.mxu0 %v1703
  %1810 = vmatprep.subr.mxu0 0.0
  %1811 = vmatpush1.msra.mxu0 %v1702
  %1812 = vmatprep.subr.mxu0 0.0
  %1813 = vmatpush1.msra.mxu0 %v1701
  %1814 = vmatprep.subr.mxu0 0.0
  %1815 = vmatpush1.msra.mxu0 %v1700
  %1816 = vmatprep.subr.mxu0 0.0
  %1817 = vmatpush1.msra.mxu0 %v1699
  %1818 = vmatprep.subr.mxu0 0.0
  %1819 = vmatpush2.msra.mxu0 %v1730
  %1820 = vmatprep.subr.mxu0 0.0
  %1821 = vmatpush2.msra.mxu0 %v1729
  %1822 = vmatprep.subr.mxu0 0.0
  %1823 = vmatpush2.msra.mxu0 %v1728
  %1824 = vmatprep.subr.mxu0 0.0
  %1825 = vmatpush2.msra.mxu0 %v1727
  %1826 = vmatprep.subr.mxu0 0.0
  %1827 = vmatpush2.msra.mxu0 %v1726
  %1828 = vmatprep.subr.mxu0 0.0
  %1829 = vmatpush2.msra.mxu0 %v1725
  %1830 = vmatprep.subr.mxu0 0.0
  %1831 = vmatpush2.msra.mxu0 %v1724
  %1832 = vmatprep.subr.mxu0 0.0
  %1833 = vmatpush2.msra.mxu0 %v1723
  %1834 = vmatprep.subr.mxu0 0.0
  %1835 = vmatpush2.msra.mxu0 %v1722
  %1836 = vmatprep.subr.mxu0 0.0
  %1837 = vmatpush2.msra.mxu0 %v1721
  %1838 = vmatprep.subr.mxu0 0.0
  %1839 = vmatpush2.msra.mxu0 %v1720
  %1840 = vmatprep.subr.mxu0 0.0
  %1841 = vmatpush2.msra.mxu0 %v1719
  %1842 = vmatprep.subr.mxu0 0.0
  %1843 = vmatpush2.msra.mxu0 %v1718
  %1844 = vmatprep.subr.mxu0 0.0
  %1845 = vmatpush2.msra.mxu0 %v1717
  %1846 = vmatprep.subr.mxu0 0.0
  %1847 = vmatpush2.msra.mxu0 %v1716
  %1848 = vmatprep.subr.mxu0 0.0
  %1849 = vmatpush2.msra.mxu0 %v1715
  %1850 = vmatprep.mubr.f32.mxu0 %v1688
  %1851 = vmatmul.mubr.f32.gmra.mxu0 %v1687
  %v1852 = vpop.f32.mrf.mxu0
  %v1853 = vadd.f32 0.0, %v1852
  %v1854 = vpop.f32.mrf.mxu0
  %1855 = vmatprep.mubr.f32.mxu0 %v1694
  %1856 = vmatmul.mubr.f32.gmra.mxu0 %v1693
  %v1857 = vpop.f32.mrf.mxu0
  %v1858 = vadd.f32 0.0, %v1857
  %v1859 = vpop.f32.mrf.mxu0
  %1860 = vdwg.mxu0
  %1861 = vmatprep.subr.mxu0 0.0
  %1862 = vmatpush1.msra.mxu0 %v1746
  %1863 = vmatprep.subr.mxu0 0.0
  %1864 = vmatpush1.msra.mxu0 %v1745
  %1865 = vmatprep.subr.mxu0 0.0
  %1866 = vmatpush1.msra.mxu0 %v1744
  %1867 = vmatprep.subr.mxu0 0.0
  %1868 = vmatpush1.msra.mxu0 %v1743
  %1869 = vmatprep.subr.mxu0 0.0
  %1870 = vmatpush1.msra.mxu0 %v1742
  %1871 = vmatprep.subr.mxu0 0.0
  %1872 = vmatpush1.msra.mxu0 %v1741
  %1873 = vmatprep.subr.mxu0 0.0
  %1874 = vmatpush1.msra.mxu0 %v1740
  %1875 = vmatprep.subr.mxu0 0.0
  %1876 = vmatpush1.msra.mxu0 %v1739
  %1877 = vmatprep.subr.mxu0 0.0
  %1878 = vmatpush1.msra.mxu0 %v1738
  %1879 = vmatprep.subr.mxu0 0.0
  %1880 = vmatpush1.msra.mxu0 %v1737
  %1881 = vmatprep.subr.mxu0 0.0
  %1882 = vmatpush1.msra.mxu0 %v1736
  %1883 = vmatprep.subr.mxu0 0.0
  %1884 = vmatpush1.msra.mxu0 %v1735
  %1885 = vmatprep.subr.mxu0 0.0
  %1886 = vmatpush1.msra.mxu0 %v1734
  %1887 = vmatprep.subr.mxu0 0.0
  %1888 = vmatpush1.msra.mxu0 %v1733
  %1889 = vmatprep.subr.mxu0 0.0
  %1890 = vmatpush1.msra.mxu0 %v1732
  %1891 = vmatprep.subr.mxu0 0.0
  %1892 = vmatpush1.msra.mxu0 %v1731
  %1893 = vmatprep.subr.mxu0 0.0
  %1894 = vmatpush2.msra.mxu0 %v1762
  %1895 = vmatprep.subr.mxu0 0.0
  %1896 = vmatpush2.msra.mxu0 %v1761
  %1897 = vmatprep.subr.mxu0 0.0
  %1898 = vmatpush2.msra.mxu0 %v1760
  %1899 = vmatprep.subr.mxu0 0.0
  %1900 = vmatpush2.msra.mxu0 %v1759
  %1901 = vmatprep.subr.mxu0 0.0
  %1902 = vmatpush2.msra.mxu0 %v1758
  %1903 = vmatprep.subr.mxu0 0.0
  %1904 = vmatpush2.msra.mxu0 %v1757
  %1905 = vmatprep.subr.mxu0 0.0
  %1906 = vmatpush2.msra.mxu0 %v1756
  %1907 = vmatprep.subr.mxu0 0.0
  %1908 = vmatpush2.msra.mxu0 %v1755
  %1909 = vmatprep.subr.mxu0 0.0
  %1910 = vmatpush2.msra.mxu0 %v1754
  %1911 = vmatprep.subr.mxu0 0.0
  %1912 = vmatpush2.msra.mxu0 %v1753
  %1913 = vmatprep.subr.mxu0 0.0
  %1914 = vmatpush2.msra.mxu0 %v1752
  %1915 = vmatprep.subr.mxu0 0.0
  %1916 = vmatpush2.msra.mxu0 %v1751
  %1917 = vmatprep.subr.mxu0 0.0
  %1918 = vmatpush2.msra.mxu0 %v1750
  %1919 = vmatprep.subr.mxu0 0.0
  %1920 = vmatpush2.msra.mxu0 %v1749
  %1921 = vmatprep.subr.mxu0 0.0
  %1922 = vmatpush2.msra.mxu0 %v1748
  %1923 = vmatprep.subr.mxu0 0.0
  %1924 = vmatpush2.msra.mxu0 %v1747
  %1925 = vmatprep.mubr.f32.mxu0 %v1690
  %1926 = vmatmul.mubr.f32.gmra.mxu0 %v1689
  %v1927 = vpop.f32.mrf.mxu0
  %v1928 = vadd.f32 %v1853, %v1927
  %v1929 = vpop.f32.mrf.mxu0
  %1930 = vmatprep.mubr.f32.mxu0 %v1696
  %1931 = vmatmul.mubr.f32.gmra.mxu0 %v1695
  %v1932 = vpop.f32.mrf.mxu0
  %v1933 = vadd.f32 %v1858, %v1932
  %v1934 = vpop.f32.mrf.mxu0
  %1935 = vdwg.mxu0
  %1936 = vmatprep.subr.mxu0 0.0
  %1937 = vmatpush1.msra.mxu0 %v1778
  %1938 = vmatprep.subr.mxu0 0.0
  %1939 = vmatpush1.msra.mxu0 %v1777
  %1940 = vmatprep.subr.mxu0 0.0
  %1941 = vmatpush1.msra.mxu0 %v1776
  %1942 = vmatprep.subr.mxu0 0.0
  %1943 = vmatpush1.msra.mxu0 %v1775
  %1944 = vmatprep.subr.mxu0 0.0
  %1945 = vmatpush1.msra.mxu0 %v1774
  %1946 = vmatprep.subr.mxu0 0.0
  %1947 = vmatpush1.msra.mxu0 %v1773
  %1948 = vmatprep.subr.mxu0 0.0
  %1949 = vmatpush1.msra.mxu0 %v1772
  %1950 = vmatprep.subr.mxu0 0.0
  %1951 = vmatpush1.msra.mxu0 %v1771
  %1952 = vmatprep.subr.mxu0 0.0
  %1953 = vmatpush1.msra.mxu0 %v1770
  %1954 = vmatprep.subr.mxu0 0.0
  %1955 = vmatpush1.msra.mxu0 %v1769
  %1956 = vmatprep.subr.mxu0 0.0
  %1957 = vmatpush1.msra.mxu0 %v1768
  %1958 = vmatprep.subr.mxu0 0.0
  %1959 = vmatpush1.msra.mxu0 %v1767
  %1960 = vmatprep.subr.mxu0 0.0
  %1961 = vmatpush1.msra.mxu0 %v1766
  %1962 = vmatprep.subr.mxu0 0.0
  %1963 = vmatpush1.msra.mxu0 %v1765
  %1964 = vmatprep.subr.mxu0 0.0
  %1965 = vmatpush1.msra.mxu0 %v1764
  %1966 = vmatprep.subr.mxu0 0.0
  %1967 = vmatpush1.msra.mxu0 %v1763
  %1968 = vmatprep.subr.mxu0 0.0
  %1969 = vmatpush2.msra.mxu0 0.0
  %1970 = vmatprep.subr.mxu0 0.0
  %1971 = vmatpush2.msra.mxu0 0.0
  %1972 = vmatprep.subr.mxu0 0.0
  %1973 = vmatpush2.msra.mxu0 0.0
  %1974 = vmatprep.subr.mxu0 0.0
  %1975 = vmatpush2.msra.mxu0 0.0
  %1976 = vmatprep.subr.mxu0 0.0
  %1977 = vmatpush2.msra.mxu0 0.0
  %1978 = vmatprep.subr.mxu0 0.0
  %1979 = vmatpush2.msra.mxu0 0.0
  %1980 = vmatprep.subr.mxu0 0.0
  %1981 = vmatpush2.msra.mxu0 0.0
  %1982 = vmatprep.subr.mxu0 0.0
  %1983 = vmatpush2.msra.mxu0 0.0
  %1984 = vmatprep.subr.mxu0 0.0
  %1985 = vmatpush2.msra.mxu0 0.0
  %1986 = vmatprep.subr.mxu0 0.0
  %1987 = vmatpush2.msra.mxu0 0.0
  %1988 = vmatprep.subr.mxu0 0.0
  %1989 = vmatpush2.msra.mxu0 0.0
  %1990 = vmatprep.subr.mxu0 0.0
  %1991 = vmatpush2.msra.mxu0 0.0
  %1992 = vmatprep.subr.mxu0 0.0
  %1993 = vmatpush2.msra.mxu0 0.0
  %1994 = vmatprep.subr.mxu0 0.0
  %1995 = vmatpush2.msra.mxu0 0.0
  %1996 = vmatprep.subr.mxu0 0.0
  %1997 = vmatpush2.msra.mxu0 0.0
  %1998 = vmatprep.subr.mxu0 0.0
  %1999 = vmatpush2.msra.mxu0 %v1779
  %2000 = vmatprep.mubr.f32.mxu0 %v1781
  %2001 = vmatmul.mubr.f32.gmra.mxu0 %v1691
  %v2002 = vpop.f32.mrf.mxu0
  %v2003 = vadd.f32 %v1928, %v2002
  %v2004 = vpop.f32.mrf.mxu0
  %2005 = vmatprep.mubr.f32.mxu0 %v1784
  %2006 = vmatmul.mubr.f32.gmra.mxu0 %v1697
  %v2007 = vpop.f32.mrf.mxu0
  %v2008 = vadd.f32 %v1933, %v2007
  %v2009 = vpop.f32.mrf.mxu0
  %2010 = vdwg.mxu0
  %2011 = vxpose.xlu0.b32.start [1/16] %v2003, 128
  %2012 = vxpose.xlu0.b32.cont [2/16] %v2008, 128
  %2013 = vxpose.xlu0.b32.cont [3/16] 0.0, 128
  %2014 = vxpose.xlu0.b32.cont [4/16] 0.0, 128
  %2015 = vxpose.xlu0.b32.cont [5/16] 0.0, 128
  %2016 = vxpose.xlu0.b32.cont [6/16] 0.0, 128
  %2017 = vxpose.xlu0.b32.cont [7/16] 0.0, 128
  %2018 = vxpose.xlu0.b32.cont [8/16] 0.0, 128
  %2019 = vxpose.xlu0.b32.cont [9/16] 0.0, 128
  %2020 = vxpose.xlu0.b32.cont [10/16] 0.0, 128
  %2021 = vxpose.xlu0.b32.cont [11/16] 0.0, 128
  %2022 = vxpose.xlu0.b32.cont [12/16] 0.0, 128
  %2023 = vxpose.xlu0.b32.cont [13/16] 0.0, 128
  %2024 = vxpose.xlu0.b32.cont [14/16] 0.0, 128
  %2025 = vxpose.xlu0.b32.cont [15/16] 0.0, 128
  %2026 = vxpose.xlu0.b32.end [16/16] 0.0, 128
  %v2027 = vpop.trf.xlu0
  %v2028 = vpop.trf.xlu0
  %v2029 = vpop.trf.xlu0
  %v2030 = vpop.trf.xlu0
  %v2031 = vpop.trf.xlu0
  %v2032 = vpop.trf.xlu0
  %v2033 = vpop.trf.xlu0
  %v2034 = vpop.trf.xlu0
  %v2035 = vpop.trf.xlu0
  %v2036 = vpop.trf.xlu0
  %v2037 = vpop.trf.xlu0
  %v2038 = vpop.trf.xlu0
  %v2039 = vpop.trf.xlu0
  %v2040 = vpop.trf.xlu0
  %v2041 = vpop.trf.xlu0
  %v2042 = vpop.trf.xlu0
  %v2043 = vld [vmem:[%s3] sm:$0xff]
  %v2044 = vld [vmem:[%s3 + $0x8] sm:$0xff]
  %vm2045 = vcmask 130048
  %v2047 = vsel %vm2045, %v2027, 0
  %2049 = vmatprep.subr.mxu0 0.0
  %2050 = vmatpush1.msra.mxu0 0.0
  %2051 = vmatprep.subr.mxu0 0.0
  %2052 = vmatpush1.msra.mxu0 0.0
  %2053 = vmatprep.subr.mxu0 0.0
  %2054 = vmatpush1.msra.mxu0 0.0
  %2055 = vmatprep.subr.mxu0 0.0
  %2056 = vmatpush1.msra.mxu0 0.0
  %2057 = vmatprep.subr.mxu0 0.0
  %2058 = vmatpush1.msra.mxu0 0.0
  %2059 = vmatprep.subr.mxu0 0.0
  %2060 = vmatpush1.msra.mxu0 0.0
  %2061 = vmatprep.subr.mxu0 0.0
  %2062 = vmatpush1.msra.mxu0 0.0
  %2063 = vmatprep.subr.mxu0 0.0
  %2064 = vmatpush1.msra.mxu0 0.0
  %2065 = vmatprep.subr.mxu0 0.0
  %2066 = vmatpush1.msra.mxu0 0.0
  %2067 = vmatprep.subr.mxu0 0.0
  %2068 = vmatpush1.msra.mxu0 0.0
  %2069 = vmatprep.subr.mxu0 0.0
  %2070 = vmatpush1.msra.mxu0 0.0
  %2071 = vmatprep.subr.mxu0 0.0
  %2072 = vmatpush1.msra.mxu0 0.0
  %2073 = vmatprep.subr.mxu0 0.0
  %2074 = vmatpush1.msra.mxu0 0.0
  %2075 = vmatprep.subr.mxu0 0.0
  %2076 = vmatpush1.msra.mxu0 0.0
  %2077 = vmatprep.subr.mxu0 0.0
  %2078 = vmatpush1.msra.mxu0 %v2044
  %2079 = vmatprep.subr.mxu0 0.0
  %2080 = vmatpush1.msra.mxu0 %v2043
  %2081 = vmatprep.subr.mxu0 0.0
  %2082 = vmatpush2.msra.mxu0 0.0
  %2083 = vmatprep.subr.mxu0 0.0
  %2084 = vmatpush2.msra.mxu0 0.0
  %2085 = vmatprep.subr.mxu0 0.0
  %2086 = vmatpush2.msra.mxu0 0.0
  %2087 = vmatprep.subr.mxu0 0.0
  %2088 = vmatpush2.msra.mxu0 0.0
  %2089 = vmatprep.subr.mxu0 0.0
  %2090 = vmatpush2.msra.mxu0 0.0
  %2091 = vmatprep.subr.mxu0 0.0
  %2092 = vmatpush2.msra.mxu0 0.0
  %2093 = vmatprep.subr.mxu0 0.0
  %2094 = vmatpush2.msra.mxu0 0.0
  %2095 = vmatprep.subr.mxu0 0.0
  %2096 = vmatpush2.msra.mxu0 0.0
  %2097 = vmatprep.subr.mxu0 0.0
  %2098 = vmatpush2.msra.mxu0 0.0
  %2099 = vmatprep.subr.mxu0 0.0
  %2100 = vmatpush2.msra.mxu0 0.0
  %2101 = vmatprep.subr.mxu0 0.0
  %2102 = vmatpush2.msra.mxu0 0.0
  %2103 = vmatprep.subr.mxu0 0.0
  %2104 = vmatpush2.msra.mxu0 0.0
  %2105 = vmatprep.subr.mxu0 0.0
  %2106 = vmatpush2.msra.mxu0 0.0
  %2107 = vmatprep.subr.mxu0 0.0
  %2108 = vmatpush2.msra.mxu0 0.0
  %2109 = vmatprep.subr.mxu0 0.0
  %2110 = vmatpush2.msra.mxu0 0.0
  %2111 = vmatprep.subr.mxu0 0.0
  %2112 = vmatpush2.msra.mxu0 0.0
  %2113 = vmatprep.mubr.f32.mxu0 0.0
  %2114 = vmatmul.mubr.f32.gmra.mxu0 %v2047
  %v2115 = vpop.f32.mrf.mxu0
  %v2116 = vadd.f32 0.0, %v2115
  %v2117 = vpop.f32.mrf.mxu0
  %2118 = vdwg.mxu0
  %2119 = vst [vmem:[%s4] sm:$0xff] %v2116
  // Predicated region
  $region18: #{adaface_forward.1} parent=0 // pred_check
    _
  $region19: #{adaface_forward.1} parent=0 // pred_check_branch
    %2121 = sbr.rel (0) target = $region21
  $region20: #{adaface_forward.1} parent=0 // pred_region
    _
  $region21: #{adaface_forward.1} parent=0 // pred_fallthru
    _
  // Predicated region
  $region22: #{adaface_forward.1} parent=0 // pred_check
    _
  $region23: #{adaface_forward.1} parent=0 // pred_check_branch
    %2123 = sbr.rel (0) target = $region25
  $region24: #{adaface_forward.1} parent=0 // pred_region
    _
  $region25: #{adaface_forward.1} parent=0 // pred_fallthru
    _

</llo_original>
